<compile_context>
chip_gen: v7x
topology: tpu7x:2x2x1
jax: 0.10.0
libtpu: 0.0.40
codegen_flags: <defaults>
</compile_context>

<pallas_src>
import math

import jax
import jax.numpy as jnp
from jax.experimental import pallas as pl
from jax.experimental.pallas import tpu as pltpu


def _head_group(H: int, D: int) -> int:
    """Largest head-group G dividing H with lane-dense G*D (multiple of 128)."""
    max_g = max(1, min(H, 512 // D)) if D <= 512 else 1
    for g in range(max_g, 0, -1):
        if H % g == 0 and (g * D) % 128 == 0:
            return g
    return H  # fall back to all heads: out block equals full H*D dim (always legal)


def _seq_tile(S: int, pref: int) -> int:
    """Sequence tile: multiple of 128 dividing S, else the full sequence."""
    t = min(pref, S)
    if t < S:
        t = (t // 128) * 128
        while t >= 128 and S % t != 0:
            t -= 128
        if t < 128:
            return S
    return t


def _make_kernel(tq: int, tk: int, D: int, G: int, where_const: float):
    inv_sqrt_d = 1.0 / math.sqrt(D)

    def kernel(q_ref, k_ref, v_ref, mask_ref, o_ref, m_ref, l_ref, acc_ref):
        # q_ref: (G, tq, D)   k_ref / v_ref: (G, tk, D)   mask_ref: (1, tk)
        # o_ref: (tq, G*D)    m_ref / l_ref: (G, tq, 1)   acc_ref: (tq, G*D) f32
        kv = pl.program_id(3)
        num_kv = pl.num_programs(3)
        q_start = pl.program_id(2) * tq
        kv_start = kv * tk

        @pl.when(kv == 0)
        def _init():
            m_ref[...] = jnp.full_like(m_ref, -jnp.inf)
            l_ref[...] = jnp.zeros_like(l_ref)
            acc_ref[...] = jnp.zeros_like(acc_ref)

        # Causal block skipping: only KV blocks intersecting the lower triangle.
        @pl.when(kv_start <= q_start + (tq - 1))
        def _compute():
            rows = q_start + jax.lax.broadcasted_iota(jnp.int32, (tq, tk), 0)
            cols = kv_start + jax.lax.broadcasted_iota(jnp.int32, (tq, tk), 1)
            causal = rows >= cols
            addmask = mask_ref[...].astype(jnp.float32)  # (1, tk), broadcasts over rows

            for g in range(G):  # static unroll over heads in the group
                qg = q_ref[g]   # (tq, D), native dtype (bf16 stays bf16 for the MXU)
                kg = k_ref[g]   # (tk, D)
                vg = v_ref[g]   # (tk, D)

                # scores = q @ k^T, contraction on D (no explicit transpose).
                s = jax.lax.dot_general(
                    qg, kg, (((1,), (1,)), ((), ())),
                    preferred_element_type=jnp.float32)
                s = s * inv_sqrt_d
                s = jnp.where(causal, s, jnp.float32(where_const)) + addmask

                m_prev = m_ref[g]                                   # (tq, 1)
                m_new = jnp.maximum(m_prev, jnp.max(s, axis=-1, keepdims=True))
                alpha = jnp.exp(m_prev - m_new)
                p = jnp.exp(s - m_new)                              # (tq, tk) f32

                l_ref[g] = alpha * l_ref[g] + jnp.sum(p, axis=-1, keepdims=True)
                pv = jnp.dot(p.astype(vg.dtype), vg,
                             preferred_element_type=jnp.float32)    # (tq, D)
                acc_ref[:, g * D:(g + 1) * D] = (
                    alpha * acc_ref[:, g * D:(g + 1) * D] + pv)
                m_ref[g] = m_new

        @pl.when(kv == num_kv - 1)
        def _finalize():
            # TODO(synk): attention_dropout is a no-op here (inference path).
            for g in range(G):
                inv_l = pl.reciprocal(l_ref[g], approx=True)        # (tq, 1), EUP
                o_ref[:, g * D:(g + 1) * D] = (
                    acc_ref[:, g * D:(g + 1) * D] * inv_l).astype(o_ref.dtype)

    return kernel


def attention_core(q, k, v, attention_mask, *, where_const: float = -10000.0,
                   q_tile: int = 128, kv_tile: int = 128):
    """Pallas implementation of AttentionCore.forward.

    q, k, v:        [B, H, S, D]
    attention_mask: [B, 1, 1, S] additive mask (or None)
    returns:        [B, S, H*D]
    """
    B, H, S, D = q.shape
    if attention_mask is None:
        attention_mask = jnp.zeros((B, 1, 1, S), dtype=q.dtype)

    G = _head_group(H, D)
    HG = H // G
    tq = _seq_tile(S, q_tile)
    tk = _seq_tile(S, kv_tile)

    kernel = _make_kernel(tq, tk, D, G, where_const)

    q_spec = pl.BlockSpec((None, G, tq, D), lambda b, hg, qi, kv: (b, hg, qi, 0))
    kv_spec = pl.BlockSpec((None, G, tk, D), lambda b, hg, qi, kv: (b, hg, kv, 0))
    mask_spec = pl.BlockSpec((None, None, 1, tk), lambda b, hg, qi, kv: (b, 0, 0, kv))
    out_spec = pl.BlockSpec((None, tq, G * D), lambda b, hg, qi, kv: (b, qi, hg))

    itemsize = jnp.dtype(q.dtype).itemsize
    cost = pl.CostEstimate(
        flops=4 * B * H * S * S * D,
        transcendentals=B * H * S * S,
        bytes_accessed=itemsize * (4 * B * H * S * D)
        + attention_mask.size * jnp.dtype(attention_mask.dtype).itemsize,
    )

    out = pl.pallas_call(
        kernel,
        out_shape=jax.ShapeDtypeStruct((B, S, H * D), q.dtype),
        grid_spec=pltpu.PrefetchScalarGridSpec(
            num_scalar_prefetch=0,
            grid=(B, HG, S // tq, S // tk),
            in_specs=[q_spec, kv_spec, kv_spec, mask_spec],
            out_specs=out_spec,
            scratch_shapes=[
                pltpu.VMEM((G, tq, 1), jnp.float32),   # running max m
                pltpu.VMEM((G, tq, 1), jnp.float32),   # running sum l
                pltpu.VMEM((tq, G * D), jnp.float32),  # output accumulator
            ],
        ),
        compiler_params=pltpu.CompilerParams(
            dimension_semantics=("parallel", "parallel", "parallel", "arbitrary"),
        ),
        cost_estimate=cost,
    )(q, k, v, attention_mask)
    return out


def _reference(q, k, v, attention_mask, where_const=-10000.0):
    B, H, S, D = q.shape
    s = jnp.einsum("bhqd,bhkd->bhqk", q, k) / math.sqrt(D)
    causal = jnp.tril(jnp.ones((S, S), dtype=bool))[None, None]
    s = jnp.where(causal, s, where_const)
    if attention_mask is not None:
        s = s + attention_mask
    p = jax.nn.softmax(s, axis=-1)
    o = jnp.einsum("bhqk,bhkd->bhqd", p, v)
    return o.transpose(0, 2, 1, 3).reshape(B, S, H * D)


if __name__ == "__main__":
    def run_case(B, H, S, D):
        key = jax.random.PRNGKey(0)
        kq, kk, kvv, kl = jax.random.split(key, 4)
        q = jax.random.normal(kq, (B, H, S, D), dtype=jnp.float32)
        k = jax.random.normal(kk, (B, H, S, D), dtype=jnp.float32)
        v = jax.random.normal(kvv, (B, H, S, D), dtype=jnp.float32)

        # Standard suffix-padding additive mask: keep a prefix of length >= 1.
        lengths = jax.random.randint(kl, (B,), minval=1, maxval=S + 1)
        keep = (jnp.arange(S)[None, :] < lengths[:, None]).astype(jnp.float32)
        attention_mask = ((1.0 - keep) * -10000.0).reshape(B, 1, 1, S)

        out = attention_core(q, k, v, attention_mask)
        out = jax.block_until_ready(out)
        ref = _reference(q, k, v, attention_mask)
        assert out.shape == (B, S, H * D), out.shape
        err = float(jnp.max(jnp.abs(out - ref)))
        assert err < 1e-2, err

    run_case(2, 4, 8, 32)     # tiny: single (q, kv) block per batch/head-group
    run_case(1, 4, 256, 32)   # exercises 2x2 q/kv tiling, online softmax, causal skip
    print("KERNEL_OK")
</pallas_src>

<mosaic_0001>
module attributes {stable_mosaic.version = 11 : i64} {
  func.func @kernel(%arg0: i32, %arg1: i32, %arg2: i32, %arg3: i32, %arg4: memref<1x4x8x32xf32, #tpu.memory_space<vmem>>, %arg5: memref<1x4x8x32xf32, #tpu.memory_space<vmem>>, %arg6: memref<1x4x8x32xf32, #tpu.memory_space<vmem>>, %arg7: memref<1x1x1x8xf32, #tpu.memory_space<vmem>>, %arg8: memref<1x8x128xf32, #tpu.memory_space<vmem>>, %arg9: memref<4x8x1xf32, #tpu.memory_space<vmem>>, %arg10: memref<4x8x1xf32, #tpu.memory_space<vmem>>, %arg11: memref<8x128xf32, #tpu.memory_space<vmem>>) attributes {dimension_semantics = [#tpu.dimension_semantics<parallel>, #tpu.dimension_semantics<parallel>, #tpu.dimension_semantics<parallel>, #tpu.dimension_semantics<arbitrary>], iteration_bounds = array<i64: 2, 1, 1, 1>, scalar_prefetch = 0 : i64, scratch_operands = 3 : i64, tpu.core_type = #tpu.core_type<tc>, window_params = [{transform_indices = @transform_0, window_bounds = array<i64: 1, 4, 8, 32>}, {transform_indices = @transform_1, window_bounds = array<i64: 1, 4, 8, 32>}, {transform_indices = @transform_2, window_bounds = array<i64: 1, 4, 8, 32>}, {transform_indices = @transform_3, window_bounds = array<i64: 1, 1, 1, 8>}, {transform_indices = @transform_4, window_bounds = array<i64: 1, 8, 128>}]} {
    %c8_i32 = arith.constant 8 : i32
    %0 = arith.muli %arg2, %c8_i32 : i32
    %c8_i32_0 = arith.constant 8 : i32
    %1 = arith.muli %arg3, %c8_i32_0 : i32
    %c0_i32 = arith.constant 0 : i32
    %2 = arith.cmpi eq, %arg3, %c0_i32 : i32
    %3 = arith.extui %2 : i1 to i32
    %c0_i32_1 = arith.constant 0 : i32
    %4 = arith.cmpi ne, %3, %c0_i32_1 : i32
    scf.if %4 {
      %cst = arith.constant 0xFF800000 : f32
      %12 = vector.broadcast %cst : f32 to vector<4x8x1xf32>
      %c0 = arith.constant 0 : index
      %c0_5 = arith.constant 0 : index
      %c0_6 = arith.constant 0 : index
      %13 = vector.load %arg9[%c0, %c0_5, %c0_6] : memref<4x8x1xf32, #tpu.memory_space<vmem>>, vector<4x8x1xf32>
      tpu.vector_store %arg9[%c0, %c0_5, %c0_6], %12 {strides = array<i32>} : memref<4x8x1xf32, #tpu.memory_space<vmem>>, vector<4x8x1xf32>,
      %cst_7 = arith.constant 0.000000e+00 : f32
      %14 = vector.broadcast %cst_7 : f32 to vector<4x8x1xf32>
      %c0_8 = arith.constant 0 : index
      %c0_9 = arith.constant 0 : index
      %c0_10 = arith.constant 0 : index
      %15 = vector.load %arg10[%c0_8, %c0_9, %c0_10] : memref<4x8x1xf32, #tpu.memory_space<vmem>>, vector<4x8x1xf32>
      tpu.vector_store %arg10[%c0_8, %c0_9, %c0_10], %14 {strides = array<i32>} : memref<4x8x1xf32, #tpu.memory_space<vmem>>, vector<4x8x1xf32>,
      %cst_11 = arith.constant 0.000000e+00 : f32
      %16 = vector.broadcast %cst_11 : f32 to vector<8x128xf32>
      %c0_12 = arith.constant 0 : index
      %c0_13 = arith.constant 0 : index
      %17 = vector.load %arg11[%c0_12, %c0_13] : memref<8x128xf32, #tpu.memory_space<vmem>>, vector<8x128xf32>
      tpu.vector_store %arg11[%c0_12, %c0_13], %16 {strides = array<i32>} : memref<8x128xf32, #tpu.memory_space<vmem>>, vector<8x128xf32>,
    } else {
    }
    %c7_i32 = arith.constant 7 : i32
    %5 = arith.addi %0, %c7_i32 : i32
    %6 = arith.cmpi sle, %1, %5 : i32
    %7 = arith.extui %6 : i1 to i32
    %c0_i32_2 = arith.constant 0 : i32
    %8 = arith.cmpi ne, %7, %c0_i32_2 : i32
    scf.if %8 {
      %12 = tpu.iota {dimensions = array<i32: 0>} : vector<8x8xi32>
      %13 = vector.broadcast %0 : i32 to vector<8x8xi32>
      %14 = arith.addi %13, %12 : vector<8x8xi32>
      %15 = tpu.iota {dimensions = array<i32: 1>} : vector<8x8xi32>
      %16 = vector.broadcast %1 : i32 to vector<8x8xi32>
      %17 = arith.addi %16, %15 : vector<8x8xi32>
      %18 = arith.cmpi sge, %14, %17 : vector<8x8xi32>
      %c0 = arith.constant 0 : index
      %c0_5 = arith.constant 0 : index
      %c0_6 = arith.constant 0 : index
      %c0_7 = arith.constant 0 : index
      %19 = vector.load %arg7[%c0, %c0_5, %c0_6, %c0_7] : memref<1x1x1x8xf32, #tpu.memory_space<vmem>>, vector<1x1x1x8xf32>
      %20 = vector.shape_cast %19 : vector<1x1x1x8xf32> to vector<1x8xf32>
      %c0_8 = arith.constant 0 : index
      %c0_9 = arith.constant 0 : index
      %c0_10 = arith.constant 0 : index
      %c0_11 = arith.constant 0 : index
      %21 = vector.load %arg4[%c0_8, %c0_9, %c0_10, %c0_11] : memref<1x4x8x32xf32, #tpu.memory_space<vmem>>, vector<1x1x8x32xf32>
      %22 = vector.shape_cast %21 : vector<1x1x8x32xf32> to vector<8x32xf32>
      %c0_12 = arith.constant 0 : index
      %c0_13 = arith.constant 0 : index
      %c0_14 = arith.constant 0 : index
      %c0_15 = arith.constant 0 : index
      %23 = vector.load %arg5[%c0_12, %c0_13, %c0_14, %c0_15] : memref<1x4x8x32xf32, #tpu.memory_space<vmem>>, vector<1x1x8x32xf32>
      %24 = vector.shape_cast %23 : vector<1x1x8x32xf32> to vector<8x32xf32>
      %c0_16 = arith.constant 0 : index
      %c0_17 = arith.constant 0 : index
      %c0_18 = arith.constant 0 : index
      %c0_19 = arith.constant 0 : index
      %25 = vector.load %arg6[%c0_16, %c0_17, %c0_18, %c0_19] : memref<1x4x8x32xf32, #tpu.memory_space<vmem>>, vector<1x1x8x32xf32>
      %26 = vector.shape_cast %25 : vector<1x1x8x32xf32> to vector<8x32xf32>
      %cst = arith.constant dense<0.000000e+00> : vector<8x8xf32>
      %27 = tpu.matmul %22, %24, %cst {dimension_numbers = #tpu.dot_dimension_numbers<[1], [1], [0], [0], [0, 0, 1, 0], [], []>} : vector<8x32xf32>, vector<8x32xf32>, vector<8x8xf32> -> vector<8x8xf32>
      %cst_20 = arith.constant 0.176776692 : f32
      %28 = vector.broadcast %cst_20 : f32 to vector<8x8xf32>
      %29 = arith.mulf %27, %28 : vector<8x8xf32>
      %cst_21 = arith.constant -1.000000e+04 : f32
      %30 = vector.broadcast %cst_21 : f32 to vector<8x8xf32>
      %31 = arith.select %18, %29, %30 : vector<8x8xi1>, vector<8x8xf32>
      %32 = vector.broadcast %20 : vector<1x8xf32> to vector<8x8xf32>
      %33 = arith.addf %31, %32 : vector<8x8xf32>
      %c0_22 = arith.constant 0 : index
      %c0_23 = arith.constant 0 : index
      %c0_24 = arith.constant 0 : index
      %34 = vector.load %arg9[%c0_22, %c0_23, %c0_24] : memref<4x8x1xf32, #tpu.memory_space<vmem>>, vector<1x8x1xf32>
      %35 = vector.shape_cast %34 : vector<1x8x1xf32> to vector<8x1xf32>
      %cst_25 = arith.constant dense<0xFF800000> : vector<8xf32>
      %36 = vector.multi_reduction <maximumf>, %33, %cst_25 [1] : vector<8x8xf32> to vector<8xf32>
      %37 = vector.shape_cast %36 : vector<8xf32> to vector<8x1xf32>
      %38 = arith.maximumf %35, %37 : vector<8x1xf32>
      %39 = arith.subf %35, %38 : vector<8x1xf32>
      %40 = math.exp %39 : vector<8x1xf32>
      %41 = vector.broadcast %38 : vector<8x1xf32> to vector<8x8xf32>
      %42 = arith.subf %33, %41 : vector<8x8xf32>
      %43 = math.exp %42 : vector<8x8xf32>
      %c0_26 = arith.constant 0 : index
      %c0_27 = arith.constant 0 : index
      %c0_28 = arith.constant 0 : index
      %44 = vector.load %arg10[%c0_26, %c0_27, %c0_28] : memref<4x8x1xf32, #tpu.memory_space<vmem>>, vector<1x8x1xf32>
      %45 = vector.shape_cast %44 : vector<1x8x1xf32> to vector<8x1xf32>
      %46 = arith.mulf %40, %45 : vector<8x1xf32>
      %cst_29 = arith.constant dense<0.000000e+00> : vector<8xf32>
      %47 = vector.multi_reduction <add>, %43, %cst_29 [1] : vector<8x8xf32> to vector<8xf32>
      %48 = vector.shape_cast %47 : vector<8xf32> to vector<8x1xf32>
      %49 = arith.addf %46, %48 : vector<8x1xf32>
      %c0_30 = arith.constant 0 : index
      %c0_31 = arith.constant 0 : index
      %c0_32 = arith.constant 0 : index
      %50 = vector.load %arg10[%c0_30, %c0_31, %c0_32] : memref<4x8x1xf32, #tpu.memory_space<vmem>>, vector<1x8x1xf32>
      %51 = vector.shape_cast %50 : vector<1x8x1xf32> to vector<8x1xf32>
      %52 = vector.shape_cast %49 : vector<8x1xf32> to vector<1x8x1xf32>
      tpu.vector_store %arg10[%c0_30, %c0_31, %c0_32], %52 {strides = array<i32>} : memref<4x8x1xf32, #tpu.memory_space<vmem>>, vector<1x8x1xf32>,
      %cst_33 = arith.constant dense<0.000000e+00> : vector<8x32xf32>
      %53 = tpu.matmul %43, %26, %cst_33 {dimension_numbers = #tpu.dot_dimension_numbers<[1], [0], [0], [1], [0, 0, 1, 1], [], []>} : vector<8x8xf32>, vector<8x32xf32>, vector<8x32xf32> -> vector<8x32xf32>
      %c0_34 = arith.constant 0 : index
      %c0_35 = arith.constant 0 : index
      %54 = vector.load %arg11[%c0_34, %c0_35] : memref<8x128xf32, #tpu.memory_space<vmem>>, vector<8x32xf32>
      %55 = vector.broadcast %40 : vector<8x1xf32> to vector<8x32xf32>
      %56 = arith.mulf %55, %54 : vector<8x32xf32>
      %57 = arith.addf %56, %53 : vector<8x32xf32>
      %c0_36 = arith.constant 0 : index
      %c0_37 = arith.constant 0 : index
      %58 = vector.load %arg11[%c0_36, %c0_37] : memref<8x128xf32, #tpu.memory_space<vmem>>, vector<8x32xf32>
      tpu.vector_store %arg11[%c0_36, %c0_37], %57 {strides = array<i32>} : memref<8x128xf32, #tpu.memory_space<vmem>>, vector<8x32xf32>,
      %c0_38 = arith.constant 0 : index
      %c0_39 = arith.constant 0 : index
      %c0_40 = arith.constant 0 : index
      %59 = vector.load %arg9[%c0_38, %c0_39, %c0_40] : memref<4x8x1xf32, #tpu.memory_space<vmem>>, vector<1x8x1xf32>
      %60 = vector.shape_cast %59 : vector<1x8x1xf32> to vector<8x1xf32>
      %61 = vector.shape_cast %38 : vector<8x1xf32> to vector<1x8x1xf32>
      tpu.vector_store %arg9[%c0_38, %c0_39, %c0_40], %61 {strides = array<i32>} : memref<4x8x1xf32, #tpu.memory_space<vmem>>, vector<1x8x1xf32>,
      %c0_41 = arith.constant 0 : index
      %c1 = arith.constant 1 : index
      %c0_42 = arith.constant 0 : index
      %c0_43 = arith.constant 0 : index
      %62 = vector.load %arg4[%c0_41, %c1, %c0_42, %c0_43] : memref<1x4x8x32xf32, #tpu.memory_space<vmem>>, vector<1x1x8x32xf32>
      %63 = vector.shape_cast %62 : vector<1x1x8x32xf32> to vector<8x32xf32>
      %c0_44 = arith.constant 0 : index
      %c1_45 = arith.constant 1 : index
      %c0_46 = arith.constant 0 : index
      %c0_47 = arith.constant 0 : index
      %64 = vector.load %arg5[%c0_44, %c1_45, %c0_46, %c0_47] : memref<1x4x8x32xf32, #tpu.memory_space<vmem>>, vector<1x1x8x32xf32>
      %65 = vector.shape_cast %64 : vector<1x1x8x32xf32> to vector<8x32xf32>
      %c0_48 = arith.constant 0 : index
      %c1_49 = arith.constant 1 : index
      %c0_50 = arith.constant 0 : index
      %c0_51 = arith.constant 0 : index
      %66 = vector.load %arg6[%c0_48, %c1_49, %c0_50, %c0_51] : memref<1x4x8x32xf32, #tpu.memory_space<vmem>>, vector<1x1x8x32xf32>
      %67 = vector.shape_cast %66 : vector<1x1x8x32xf32> to vector<8x32xf32>
      %cst_52 = arith.constant dense<0.000000e+00> : vector<8x8xf32>
      %68 = tpu.matmul %63, %65, %cst_52 {dimension_numbers = #tpu.dot_dimension_numbers<[1], [1], [0], [0], [0, 0, 1, 0], [], []>} : vector<8x32xf32>, vector<8x32xf32>, vector<8x8xf32> -> vector<8x8xf32>
      %cst_53 = arith.constant 0.176776692 : f32
      %69 = vector.broadcast %cst_53 : f32 to vector<8x8xf32>
      %70 = arith.mulf %68, %69 : vector<8x8xf32>
      %cst_54 = arith.constant -1.000000e+04 : f32
      %71 = vector.broadcast %cst_54 : f32 to vector<8x8xf32>
      %72 = arith.select %18, %70, %71 : vector<8x8xi1>, vector<8x8xf32>
      %73 = vector.broadcast %20 : vector<1x8xf32> to vector<8x8xf32>
      %74 = arith.addf %72, %73 : vector<8x8xf32>
      %c1_55 = arith.constant 1 : index
      %c0_56 = arith.constant 0 : index
      %c0_57 = arith.constant 0 : index
      %75 = vector.load %arg9[%c1_55, %c0_56, %c0_57] : memref<4x8x1xf32, #tpu.memory_space<vmem>>, vector<1x8x1xf32>
      %76 = vector.shape_cast %75 : vector<1x8x1xf32> to vector<8x1xf32>
      %cst_58 = arith.constant dense<0xFF800000> : vector<8xf32>
      %77 = vector.multi_reduction <maximumf>, %74, %cst_58 [1] : vector<8x8xf32> to vector<8xf32>
      %78 = vector.shape_cast %77 : vector<8xf32> to vector<8x1xf32>
      %79 = arith.maximumf %76, %78 : vector<8x1xf32>
      %80 = arith.subf %76, %79 : vector<8x1xf32>
      %81 = math.exp %80 : vector<8x1xf32>
      %82 = vector.broadcast %79 : vector<8x1xf32> to vector<8x8xf32>
      %83 = arith.subf %74, %82 : vector<8x8xf32>
      %84 = math.exp %83 : vector<8x8xf32>
      %c1_59 = arith.constant 1 : index
      %c0_60 = arith.constant 0 : index
      %c0_61 = arith.constant 0 : index
      %85 = vector.load %arg10[%c1_59, %c0_60, %c0_61] : memref<4x8x1xf32, #tpu.memory_space<vmem>>, vector<1x8x1xf32>
      %86 = vector.shape_cast %85 : vector<1x8x1xf32> to vector<8x1xf32>
      %87 = arith.mulf %81, %86 : vector<8x1xf32>
      %cst_62 = arith.constant dense<0.000000e+00> : vector<8xf32>
      %88 = vector.multi_reduction <add>, %84, %cst_62 [1] : vector<8x8xf32> to vector<8xf32>
      %89 = vector.shape_cast %88 : vector<8xf32> to vector<8x1xf32>
      %90 = arith.addf %87, %89 : vector<8x1xf32>
      %c1_63 = arith.constant 1 : index
      %c0_64 = arith.constant 0 : index
      %c0_65 = arith.constant 0 : index
      %91 = vector.load %arg10[%c1_63, %c0_64, %c0_65] : memref<4x8x1xf32, #tpu.memory_space<vmem>>, vector<1x8x1xf32>
      %92 = vector.shape_cast %91 : vector<1x8x1xf32> to vector<8x1xf32>
      %93 = vector.shape_cast %90 : vector<8x1xf32> to vector<1x8x1xf32>
      tpu.vector_store %arg10[%c1_63, %c0_64, %c0_65], %93 {strides = array<i32>} : memref<4x8x1xf32, #tpu.memory_space<vmem>>, vector<1x8x1xf32>,
      %cst_66 = arith.constant dense<0.000000e+00> : vector<8x32xf32>
      %94 = tpu.matmul %84, %67, %cst_66 {dimension_numbers = #tpu.dot_dimension_numbers<[1], [0], [0], [1], [0, 0, 1, 1], [], []>} : vector<8x8xf32>, vector<8x32xf32>, vector<8x32xf32> -> vector<8x32xf32>
      %c0_67 = arith.constant 0 : index
      %c32 = arith.constant 32 : index
      %95 = vector.load %arg11[%c0_67, %c32] : memref<8x128xf32, #tpu.memory_space<vmem>>, vector<8x32xf32>
      %96 = vector.broadcast %81 : vector<8x1xf32> to vector<8x32xf32>
      %97 = arith.mulf %96, %95 : vector<8x32xf32>
      %98 = arith.addf %97, %94 : vector<8x32xf32>
      %c0_68 = arith.constant 0 : index
      %c32_69 = arith.constant 32 : index
      %99 = vector.load %arg11[%c0_68, %c32_69] : memref<8x128xf32, #tpu.memory_space<vmem>>, vector<8x32xf32>
      tpu.vector_store %arg11[%c0_68, %c32_69], %98 {strides = array<i32>} : memref<8x128xf32, #tpu.memory_space<vmem>>, vector<8x32xf32>,
      %c1_70 = arith.constant 1 : index
      %c0_71 = arith.constant 0 : index
      %c0_72 = arith.constant 0 : index
      %100 = vector.load %arg9[%c1_70, %c0_71, %c0_72] : memref<4x8x1xf32, #tpu.memory_space<vmem>>, vector<1x8x1xf32>
      %101 = vector.shape_cast %100 : vector<1x8x1xf32> to vector<8x1xf32>
      %102 = vector.shape_cast %79 : vector<8x1xf32> to vector<1x8x1xf32>
      tpu.vector_store %arg9[%c1_70, %c0_71, %c0_72], %102 {strides = array<i32>} : memref<4x8x1xf32, #tpu.memory_space<vmem>>, vector<1x8x1xf32>,
      %c0_73 = arith.constant 0 : index
      %c2 = arith.constant 2 : index
      %c0_74 = arith.constant 0 : index
      %c0_75 = arith.constant 0 : index
      %103 = vector.load %arg4[%c0_73, %c2, %c0_74, %c0_75] : memref<1x4x8x32xf32, #tpu.memory_space<vmem>>, vector<1x1x8x32xf32>
      %104 = vector.shape_cast %103 : vector<1x1x8x32xf32> to vector<8x32xf32>
      %c0_76 = arith.constant 0 : index
      %c2_77 = arith.constant 2 : index
      %c0_78 = arith.constant 0 : index
      %c0_79 = arith.constant 0 : index
      %105 = vector.load %arg5[%c0_76, %c2_77, %c0_78, %c0_79] : memref<1x4x8x32xf32, #tpu.memory_space<vmem>>, vector<1x1x8x32xf32>
      %106 = vector.shape_cast %105 : vector<1x1x8x32xf32> to vector<8x32xf32>
      %c0_80 = arith.constant 0 : index
      %c2_81 = arith.constant 2 : index
      %c0_82 = arith.constant 0 : index
      %c0_83 = arith.constant 0 : index
      %107 = vector.load %arg6[%c0_80, %c2_81, %c0_82, %c0_83] : memref<1x4x8x32xf32, #tpu.memory_space<vmem>>, vector<1x1x8x32xf32>
      %108 = vector.shape_cast %107 : vector<1x1x8x32xf32> to vector<8x32xf32>
      %cst_84 = arith.constant dense<0.000000e+00> : vector<8x8xf32>
      %109 = tpu.matmul %104, %106, %cst_84 {dimension_numbers = #tpu.dot_dimension_numbers<[1], [1], [0], [0], [0, 0, 1, 0], [], []>} : vector<8x32xf32>, vector<8x32xf32>, vector<8x8xf32> -> vector<8x8xf32>
      %cst_85 = arith.constant 0.176776692 : f32
      %110 = vector.broadcast %cst_85 : f32 to vector<8x8xf32>
      %111 = arith.mulf %109, %110 : vector<8x8xf32>
      %cst_86 = arith.constant -1.000000e+04 : f32
      %112 = vector.broadcast %cst_86 : f32 to vector<8x8xf32>
      %113 = arith.select %18, %111, %112 : vector<8x8xi1>, vector<8x8xf32>
      %114 = vector.broadcast %20 : vector<1x8xf32> to vector<8x8xf32>
      %115 = arith.addf %113, %114 : vector<8x8xf32>
      %c2_87 = arith.constant 2 : index
      %c0_88 = arith.constant 0 : index
      %c0_89 = arith.constant 0 : index
      %116 = vector.load %arg9[%c2_87, %c0_88, %c0_89] : memref<4x8x1xf32, #tpu.memory_space<vmem>>, vector<1x8x1xf32>
      %117 = vector.shape_cast %116 : vector<1x8x1xf32> to vector<8x1xf32>
      %cst_90 = arith.constant dense<0xFF800000> : vector<8xf32>
      %118 = vector.multi_reduction <maximumf>, %115, %cst_90 [1] : vector<8x8xf32> to vector<8xf32>
      %119 = vector.shape_cast %118 : vector<8xf32> to vector<8x1xf32>
      %120 = arith.maximumf %117, %119 : vector<8x1xf32>
      %121 = arith.subf %117, %120 : vector<8x1xf32>
      %122 = math.exp %121 : vector<8x1xf32>
      %123 = vector.broadcast %120 : vector<8x1xf32> to vector<8x8xf32>
      %124 = arith.subf %115, %123 : vector<8x8xf32>
      %125 = math.exp %124 : vector<8x8xf32>
      %c2_91 = arith.constant 2 : index
      %c0_92 = arith.constant 0 : index
      %c0_93 = arith.constant 0 : index
      %126 = vector.load %arg10[%c2_91, %c0_92, %c0_93] : memref<4x8x1xf32, #tpu.memory_space<vmem>>, vector<1x8x1xf32>
      %127 = vector.shape_cast %126 : vector<1x8x1xf32> to vector<8x1xf32>
      %128 = arith.mulf %122, %127 : vector<8x1xf32>
      %cst_94 = arith.constant dense<0.000000e+00> : vector<8xf32>
      %129 = vector.multi_reduction <add>, %125, %cst_94 [1] : vector<8x8xf32> to vector<8xf32>
      %130 = vector.shape_cast %129 : vector<8xf32> to vector<8x1xf32>
      %131 = arith.addf %128, %130 : vector<8x1xf32>
      %c2_95 = arith.constant 2 : index
      %c0_96 = arith.constant 0 : index
      %c0_97 = arith.constant 0 : index
      %132 = vector.load %arg10[%c2_95, %c0_96, %c0_97] : memref<4x8x1xf32, #tpu.memory_space<vmem>>, vector<1x8x1xf32>
      %133 = vector.shape_cast %132 : vector<1x8x1xf32> to vector<8x1xf32>
      %134 = vector.shape_cast %131 : vector<8x1xf32> to vector<1x8x1xf32>
      tpu.vector_store %arg10[%c2_95, %c0_96, %c0_97], %134 {strides = array<i32>} : memref<4x8x1xf32, #tpu.memory_space<vmem>>, vector<1x8x1xf32>,
      %cst_98 = arith.constant dense<0.000000e+00> : vector<8x32xf32>
      %135 = tpu.matmul %125, %108, %cst_98 {dimension_numbers = #tpu.dot_dimension_numbers<[1], [0], [0], [1], [0, 0, 1, 1], [], []>} : vector<8x8xf32>, vector<8x32xf32>, vector<8x32xf32> -> vector<8x32xf32>
      %c0_99 = arith.constant 0 : index
      %c64 = arith.constant 64 : index
      %136 = vector.load %arg11[%c0_99, %c64] : memref<8x128xf32, #tpu.memory_space<vmem>>, vector<8x32xf32>
      %137 = vector.broadcast %122 : vector<8x1xf32> to vector<8x32xf32>
      %138 = arith.mulf %137, %136 : vector<8x32xf32>
      %139 = arith.addf %138, %135 : vector<8x32xf32>
      %c0_100 = arith.constant 0 : index
      %c64_101 = arith.constant 64 : index
      %140 = vector.load %arg11[%c0_100, %c64_101] : memref<8x128xf32, #tpu.memory_space<vmem>>, vector<8x32xf32>
      tpu.vector_store %arg11[%c0_100, %c64_101], %139 {strides = array<i32>} : memref<8x128xf32, #tpu.memory_space<vmem>>, vector<8x32xf32>,
      %c2_102 = arith.constant 2 : index
      %c0_103 = arith.constant 0 : index
      %c0_104 = arith.constant 0 : index
      %141 = vector.load %arg9[%c2_102, %c0_103, %c0_104] : memref<4x8x1xf32, #tpu.memory_space<vmem>>, vector<1x8x1xf32>
      %142 = vector.shape_cast %141 : vector<1x8x1xf32> to vector<8x1xf32>
      %143 = vector.shape_cast %120 : vector<8x1xf32> to vector<1x8x1xf32>
      tpu.vector_store %arg9[%c2_102, %c0_103, %c0_104], %143 {strides = array<i32>} : memref<4x8x1xf32, #tpu.memory_space<vmem>>, vector<1x8x1xf32>,
      %c0_105 = arith.constant 0 : index
      %c3 = arith.constant 3 : index
      %c0_106 = arith.constant 0 : index
      %c0_107 = arith.constant 0 : index
      %144 = vector.load %arg4[%c0_105, %c3, %c0_106, %c0_107] : memref<1x4x8x32xf32, #tpu.memory_space<vmem>>, vector<1x1x8x32xf32>
      %145 = vector.shape_cast %144 : vector<1x1x8x32xf32> to vector<8x32xf32>
      %c0_108 = arith.constant 0 : index
      %c3_109 = arith.constant 3 : index
      %c0_110 = arith.constant 0 : index
      %c0_111 = arith.constant 0 : index
      %146 = vector.load %arg5[%c0_108, %c3_109, %c0_110, %c0_111] : memref<1x4x8x32xf32, #tpu.memory_space<vmem>>, vector<1x1x8x32xf32>
      %147 = vector.shape_cast %146 : vector<1x1x8x32xf32> to vector<8x32xf32>
      %c0_112 = arith.constant 0 : index
      %c3_113 = arith.constant 3 : index
      %c0_114 = arith.constant 0 : index
      %c0_115 = arith.constant 0 : index
      %148 = vector.load %arg6[%c0_112, %c3_113, %c0_114, %c0_115] : memref<1x4x8x32xf32, #tpu.memory_space<vmem>>, vector<1x1x8x32xf32>
      %149 = vector.shape_cast %148 : vector<1x1x8x32xf32> to vector<8x32xf32>
      %cst_116 = arith.constant dense<0.000000e+00> : vector<8x8xf32>
      %150 = tpu.matmul %145, %147, %cst_116 {dimension_numbers = #tpu.dot_dimension_numbers<[1], [1], [0], [0], [0, 0, 1, 0], [], []>} : vector<8x32xf32>, vector<8x32xf32>, vector<8x8xf32> -> vector<8x8xf32>
      %cst_117 = arith.constant 0.176776692 : f32
      %151 = vector.broadcast %cst_117 : f32 to vector<8x8xf32>
      %152 = arith.mulf %150, %151 : vector<8x8xf32>
      %cst_118 = arith.constant -1.000000e+04 : f32
      %153 = vector.broadcast %cst_118 : f32 to vector<8x8xf32>
      %154 = arith.select %18, %152, %153 : vector<8x8xi1>, vector<8x8xf32>
      %155 = vector.broadcast %20 : vector<1x8xf32> to vector<8x8xf32>
      %156 = arith.addf %154, %155 : vector<8x8xf32>
      %c3_119 = arith.constant 3 : index
      %c0_120 = arith.constant 0 : index
      %c0_121 = arith.constant 0 : index
      %157 = vector.load %arg9[%c3_119, %c0_120, %c0_121] : memref<4x8x1xf32, #tpu.memory_space<vmem>>, vector<1x8x1xf32>
      %158 = vector.shape_cast %157 : vector<1x8x1xf32> to vector<8x1xf32>
      %cst_122 = arith.constant dense<0xFF800000> : vector<8xf32>
      %159 = vector.multi_reduction <maximumf>, %156, %cst_122 [1] : vector<8x8xf32> to vector<8xf32>
      %160 = vector.shape_cast %159 : vector<8xf32> to vector<8x1xf32>
      %161 = arith.maximumf %158, %160 : vector<8x1xf32>
      %162 = arith.subf %158, %161 : vector<8x1xf32>
      %163 = math.exp %162 : vector<8x1xf32>
      %164 = vector.broadcast %161 : vector<8x1xf32> to vector<8x8xf32>
      %165 = arith.subf %156, %164 : vector<8x8xf32>
      %166 = math.exp %165 : vector<8x8xf32>
      %c3_123 = arith.constant 3 : index
      %c0_124 = arith.constant 0 : index
      %c0_125 = arith.constant 0 : index
      %167 = vector.load %arg10[%c3_123, %c0_124, %c0_125] : memref<4x8x1xf32, #tpu.memory_space<vmem>>, vector<1x8x1xf32>
      %168 = vector.shape_cast %167 : vector<1x8x1xf32> to vector<8x1xf32>
      %169 = arith.mulf %163, %168 : vector<8x1xf32>
      %cst_126 = arith.constant dense<0.000000e+00> : vector<8xf32>
      %170 = vector.multi_reduction <add>, %166, %cst_126 [1] : vector<8x8xf32> to vector<8xf32>
      %171 = vector.shape_cast %170 : vector<8xf32> to vector<8x1xf32>
      %172 = arith.addf %169, %171 : vector<8x1xf32>
      %c3_127 = arith.constant 3 : index
      %c0_128 = arith.constant 0 : index
      %c0_129 = arith.constant 0 : index
      %173 = vector.load %arg10[%c3_127, %c0_128, %c0_129] : memref<4x8x1xf32, #tpu.memory_space<vmem>>, vector<1x8x1xf32>
      %174 = vector.shape_cast %173 : vector<1x8x1xf32> to vector<8x1xf32>
      %175 = vector.shape_cast %172 : vector<8x1xf32> to vector<1x8x1xf32>
      tpu.vector_store %arg10[%c3_127, %c0_128, %c0_129], %175 {strides = array<i32>} : memref<4x8x1xf32, #tpu.memory_space<vmem>>, vector<1x8x1xf32>,
      %cst_130 = arith.constant dense<0.000000e+00> : vector<8x32xf32>
      %176 = tpu.matmul %166, %149, %cst_130 {dimension_numbers = #tpu.dot_dimension_numbers<[1], [0], [0], [1], [0, 0, 1, 1], [], []>} : vector<8x8xf32>, vector<8x32xf32>, vector<8x32xf32> -> vector<8x32xf32>
      %c0_131 = arith.constant 0 : index
      %c96 = arith.constant 96 : index
      %177 = vector.load %arg11[%c0_131, %c96] : memref<8x128xf32, #tpu.memory_space<vmem>>, vector<8x32xf32>
      %178 = vector.broadcast %163 : vector<8x1xf32> to vector<8x32xf32>
      %179 = arith.mulf %178, %177 : vector<8x32xf32>
      %180 = arith.addf %179, %176 : vector<8x32xf32>
      %c0_132 = arith.constant 0 : index
      %c96_133 = arith.constant 96 : index
      %181 = vector.load %arg11[%c0_132, %c96_133] : memref<8x128xf32, #tpu.memory_space<vmem>>, vector<8x32xf32>
      tpu.vector_store %arg11[%c0_132, %c96_133], %180 {strides = array<i32>} : memref<8x128xf32, #tpu.memory_space<vmem>>, vector<8x32xf32>,
      %c3_134 = arith.constant 3 : index
      %c0_135 = arith.constant 0 : index
      %c0_136 = arith.constant 0 : index
      %182 = vector.load %arg9[%c3_134, %c0_135, %c0_136] : memref<4x8x1xf32, #tpu.memory_space<vmem>>, vector<1x8x1xf32>
      %183 = vector.shape_cast %182 : vector<1x8x1xf32> to vector<8x1xf32>
      %184 = vector.shape_cast %161 : vector<8x1xf32> to vector<1x8x1xf32>
      tpu.vector_store %arg9[%c3_134, %c0_135, %c0_136], %184 {strides = array<i32>} : memref<4x8x1xf32, #tpu.memory_space<vmem>>, vector<1x8x1xf32>,
    } else {
    }
    %c0_i32_3 = arith.constant 0 : i32
    %9 = arith.cmpi eq, %arg3, %c0_i32_3 : i32
    %10 = arith.extui %9 : i1 to i32
    %c0_i32_4 = arith.constant 0 : i32
    %11 = arith.cmpi ne, %10, %c0_i32_4 : i32
    scf.if %11 {
      %c0 = arith.constant 0 : index
      %c0_5 = arith.constant 0 : index
      %c0_6 = arith.constant 0 : index
      %12 = vector.load %arg10[%c0, %c0_5, %c0_6] : memref<4x8x1xf32, #tpu.memory_space<vmem>>, vector<1x8x1xf32>
      %13 = vector.shape_cast %12 : vector<1x8x1xf32> to vector<8x1xf32>
      %14 = tpu.reciprocal %13 {approx = true} : vector<8x1xf32> -> vector<8x1xf32>
      %c0_7 = arith.constant 0 : index
      %c0_8 = arith.constant 0 : index
      %15 = vector.load %arg11[%c0_7, %c0_8] : memref<8x128xf32, #tpu.memory_space<vmem>>, vector<8x32xf32>
      %16 = vector.broadcast %14 : vector<8x1xf32> to vector<8x32xf32>
      %17 = arith.mulf %15, %16 : vector<8x32xf32>
      %c0_9 = arith.constant 0 : index
      %c0_10 = arith.constant 0 : index
      %c0_11 = arith.constant 0 : index
      %18 = vector.load %arg8[%c0_9, %c0_10, %c0_11] : memref<1x8x128xf32, #tpu.memory_space<vmem>>, vector<1x8x32xf32>
      %19 = vector.shape_cast %18 : vector<1x8x32xf32> to vector<8x32xf32>
      %20 = vector.shape_cast %17 : vector<8x32xf32> to vector<1x8x32xf32>
      tpu.vector_store %arg8[%c0_9, %c0_10, %c0_11], %20 {strides = array<i32>} : memref<1x8x128xf32, #tpu.memory_space<vmem>>, vector<1x8x32xf32>,
      %c1 = arith.constant 1 : index
      %c0_12 = arith.constant 0 : index
      %c0_13 = arith.constant 0 : index
      %21 = vector.load %arg10[%c1, %c0_12, %c0_13] : memref<4x8x1xf32, #tpu.memory_space<vmem>>, vector<1x8x1xf32>
      %22 = vector.shape_cast %21 : vector<1x8x1xf32> to vector<8x1xf32>
      %23 = tpu.reciprocal %22 {approx = true} : vector<8x1xf32> -> vector<8x1xf32>
      %c0_14 = arith.constant 0 : index
      %c32 = arith.constant 32 : index
      %24 = vector.load %arg11[%c0_14, %c32] : memref<8x128xf32, #tpu.memory_space<vmem>>, vector<8x32xf32>
      %25 = vector.broadcast %23 : vector<8x1xf32> to vector<8x32xf32>
      %26 = arith.mulf %24, %25 : vector<8x32xf32>
      %c0_15 = arith.constant 0 : index
      %c0_16 = arith.constant 0 : index
      %c32_17 = arith.constant 32 : index
      %27 = vector.load %arg8[%c0_15, %c0_16, %c32_17] : memref<1x8x128xf32, #tpu.memory_space<vmem>>, vector<1x8x32xf32>
      %28 = vector.shape_cast %27 : vector<1x8x32xf32> to vector<8x32xf32>
      %29 = vector.shape_cast %26 : vector<8x32xf32> to vector<1x8x32xf32>
      tpu.vector_store %arg8[%c0_15, %c0_16, %c32_17], %29 {strides = array<i32>} : memref<1x8x128xf32, #tpu.memory_space<vmem>>, vector<1x8x32xf32>,
      %c2 = arith.constant 2 : index
      %c0_18 = arith.constant 0 : index
      %c0_19 = arith.constant 0 : index
      %30 = vector.load %arg10[%c2, %c0_18, %c0_19] : memref<4x8x1xf32, #tpu.memory_space<vmem>>, vector<1x8x1xf32>
      %31 = vector.shape_cast %30 : vector<1x8x1xf32> to vector<8x1xf32>
      %32 = tpu.reciprocal %31 {approx = true} : vector<8x1xf32> -> vector<8x1xf32>
      %c0_20 = arith.constant 0 : index
      %c64 = arith.constant 64 : index
      %33 = vector.load %arg11[%c0_20, %c64] : memref<8x128xf32, #tpu.memory_space<vmem>>, vector<8x32xf32>
      %34 = vector.broadcast %32 : vector<8x1xf32> to vector<8x32xf32>
      %35 = arith.mulf %33, %34 : vector<8x32xf32>
      %c0_21 = arith.constant 0 : index
      %c0_22 = arith.constant 0 : index
      %c64_23 = arith.constant 64 : index
      %36 = vector.load %arg8[%c0_21, %c0_22, %c64_23] : memref<1x8x128xf32, #tpu.memory_space<vmem>>, vector<1x8x32xf32>
      %37 = vector.shape_cast %36 : vector<1x8x32xf32> to vector<8x32xf32>
      %38 = vector.shape_cast %35 : vector<8x32xf32> to vector<1x8x32xf32>
      tpu.vector_store %arg8[%c0_21, %c0_22, %c64_23], %38 {strides = array<i32>} : memref<1x8x128xf32, #tpu.memory_space<vmem>>, vector<1x8x32xf32>,
      %c3 = arith.constant 3 : index
      %c0_24 = arith.constant 0 : index
      %c0_25 = arith.constant 0 : index
      %39 = vector.load %arg10[%c3, %c0_24, %c0_25] : memref<4x8x1xf32, #tpu.memory_space<vmem>>, vector<1x8x1xf32>
      %40 = vector.shape_cast %39 : vector<1x8x1xf32> to vector<8x1xf32>
      %41 = tpu.reciprocal %40 {approx = true} : vector<8x1xf32> -> vector<8x1xf32>
      %c0_26 = arith.constant 0 : index
      %c96 = arith.constant 96 : index
      %42 = vector.load %arg11[%c0_26, %c96] : memref<8x128xf32, #tpu.memory_space<vmem>>, vector<8x32xf32>
      %43 = vector.broadcast %41 : vector<8x1xf32> to vector<8x32xf32>
      %44 = arith.mulf %42, %43 : vector<8x32xf32>
      %c0_27 = arith.constant 0 : index
      %c0_28 = arith.constant 0 : index
      %c96_29 = arith.constant 96 : index
      %45 = vector.load %arg8[%c0_27, %c0_28, %c96_29] : memref<1x8x128xf32, #tpu.memory_space<vmem>>, vector<1x8x32xf32>
      %46 = vector.shape_cast %45 : vector<1x8x32xf32> to vector<8x32xf32>
      %47 = vector.shape_cast %44 : vector<8x32xf32> to vector<1x8x32xf32>
      tpu.vector_store %arg8[%c0_27, %c0_28, %c96_29], %47 {strides = array<i32>} : memref<1x8x128xf32, #tpu.memory_space<vmem>>, vector<1x8x32xf32>,
    } else {
    }
    return
  }
  func.func @transform_0(%arg0: i32, %arg1: i32, %arg2: i32, %arg3: i32) -> (i32, i32, i32, i32) {
    %c0_i32 = arith.constant 0 : i32
    %c0_i32_0 = arith.constant 0 : i32
    return %arg0, %arg1, %arg2, %c0_i32 : i32, i32, i32, i32
  }
  func.func @transform_1(%arg0: i32, %arg1: i32, %arg2: i32, %arg3: i32) -> (i32, i32, i32, i32) {
    %c0_i32 = arith.constant 0 : i32
    %c0_i32_0 = arith.constant 0 : i32
    return %arg0, %arg1, %arg3, %c0_i32 : i32, i32, i32, i32
  }
  func.func @transform_2(%arg0: i32, %arg1: i32, %arg2: i32, %arg3: i32) -> (i32, i32, i32, i32) {
    %c0_i32 = arith.constant 0 : i32
    %c0_i32_0 = arith.constant 0 : i32
    return %arg0, %arg1, %arg3, %c0_i32 : i32, i32, i32, i32
  }
  func.func @transform_3(%arg0: i32, %arg1: i32, %arg2: i32, %arg3: i32) -> (i32, i32, i32, i32) {
    %c0_i32 = arith.constant 0 : i32
    %c0_i32_0 = arith.constant 0 : i32
    %c0_i32_1 = arith.constant 0 : i32
    return %arg0, %c0_i32, %c0_i32_0, %arg3 : i32, i32, i32, i32
  }
  func.func @transform_4(%arg0: i32, %arg1: i32, %arg2: i32, %arg3: i32) -> (i32, i32, i32) {
    %c0_i32 = arith.constant 0 : i32
    return %arg0, %arg2, %arg1 : i32, i32, i32
  }
}

</mosaic_0001>

<llo_original>
// kernel: tpu_custom_call.1
$region0: #{tpu_custom_call.1}
  #allocation0 [shape = 'u32[]', space=smem, size = 0x4, offset = 0x4, fixed_abs, tag = 'smem constant byte address 0x4 - core index']
  #allocation1 [shape = 'u32[144,128]{1,0:T(1,128)}', space=vmem, size = 0x12000, scoped, tag = 'internal scratch']
  #allocation2 [shape = 'f32[4,8,1]{2,1,0:T(8,128)}', space=vmem, size = 0x4000, scoped, tag = 'scratch operand']
  #allocation3 [shape = 'f32[4,8,1]{2,1,0:T(8,128)}', space=vmem, size = 0x4000, scoped, tag = 'scratch operand']
  #allocation4 [shape = 'f32[8,128]{1,0:T(8,128)}', space=vmem, size = 0x1000, scoped, tag = 'scratch operand']
  %s0 = inlined_call_operand.hbm [shape: f32[2,4,8,32], index: 0, kind: input, shape index: {}]
  %s1 = inlined_call_operand.hbm [shape: f32[2,4,8,32], index: 1, kind: input, shape index: {}]
  %s2 = inlined_call_operand.hbm [shape: f32[2,4,8,32], index: 2, kind: input, shape index: {}]
  %s3 = inlined_call_operand.vmem [shape: f32[2,1,1,8], index: 3, kind: input, shape index: {}]
  %s4 = inlined_call_operand.hbm [shape: f32[2,8,128], index: 4, kind: output, shape index: {}]
  %s5 = sld [smem:[#allocation0]]
  $region73: #{tpu_custom_call.1} parent=0
    _
  %s7 = ssub.s32 1, %s5
  %s8 = scalar_select 0, %s7, %s5
  $region1: #{tpu_custom_call.1} parent=0
    #allocation5 [shape = 'u8[32768]{0}', space=vmem, size = 0x8000, scoped, tag = 'input window, operand 0']
    #allocation6 [shape = 's32[2]{0}', space=sflag, size = 0x8, scoped, tag = 'scoped memory for tpu_custom_call.1']
    #allocation7 [shape = 's32[2]{0}', space=sflag, size = 0x8, scoped, tag = 'scoped memory for tpu_custom_call.1']
    #allocation8 [shape = 'u8[32768]{0}', space=vmem, size = 0x8000, scoped, tag = 'input window, operand 1']
    #allocation9 [shape = 's32[2]{0}', space=sflag, size = 0x8, scoped, tag = 'scoped memory for tpu_custom_call.1']
    #allocation10 [shape = 'u8[32768]{0}', space=vmem, size = 0x8000, scoped, tag = 'input window, operand 2']
    #allocation11 [shape = 'u8[8192]{0}', space=vmem, size = 0x2000, scoped, tag = 'output window, operand 0']
    %9 = vsyncpa [#allocation6], 0
    %s10 = scalar_lea.sflag [#allocation6], 1
    %11 = vsyncpa %s10, 0
    %12 = vsyncpa [#allocation9], 0
    %s13 = scalar_lea.sflag [#allocation9], 1
    %14 = vsyncpa %s13, 0
    %15 = vsyncpa [#allocation7], 0
    %s16 = scalar_lea.sflag [#allocation7], 1
    %17 = vsyncpa %s16, 0
    loop: start=0, step=1, limit=4
    $region2: #{tpu_custom_call.1} parent=1 // loop_pre_header
      _
    $region3: #{tpu_custom_call.1} parent=1 // loop_header
      %s19 = sphi 0, %s23
      %p20 = scmp.ge.s32.totalorder %s19, 4
      %s26 = sphi 0, %s52
      %s27 = sphi 0, %s48
      %s28 = sphi 0, %s44
      %s29 = sphi 0, %s40
      %s30 = sphi 0, %s26
      %s31 = sphi 0, %s27
      %s32 = sphi 0, %s28
      %s33 = sphi 0, %s29
      %s34 = sphi 0, %s30
      %s35 = sphi 0, %s31
      %s36 = sphi 0, %s32
      %s37 = sphi 0, %s33
      %s59 = sphi 0, %s61
      %s62 = sphi 0, %s59
      %s63 = sphi 0, %s62
      %s79 = sphi 0, %s63
      %s89 = sphi 0, %s91
      %s92 = sphi 0, %s89
      %s93 = sphi 0, %s92
      %s109 = sphi 0, %s93
      %s119 = sphi 0, %s121
      %s122 = sphi 0, %s119
      %s123 = sphi 0, %s122
      %s139 = sphi 0, %s123
      %s147 = sphi 0, %s149
      %s150 = sphi 0, %s147
      %s151 = sphi 0, %s150
      %s167 = sphi 0, %s151
      %s177 = sphi 0, %s179
      %s180 = sphi 0, %s177
      %s181 = sphi 0, %s180
      %s197 = sphi 0, %s181
    $region4: #{tpu_custom_call.1} parent=1 // loop_header_branch
      %22 = sbr.rel (%p20) target = $region8
    $region5: #{tpu_custom_call.1} parent=1 // loop_body
      %s24 = ssub.s32 %s19, 1
      %s25 = ssub.s32 %s19, 2
      %s38 = sadd.s32 1, %s29
      %p39 = scmp.ge.s32.totalorder %s38, 1
      %s40 = scalar_select %p39, 0, %s38
      %s41 = sadd.s32 1, %s28
      %s42 = scalar_select %p39, %s41, %s28
      %p43 = scmp.ge.s32.totalorder %s42, 1
      %s44 = scalar_select %p43, 0, %s42
      %s45 = sadd.s32 1, %s27
      %s46 = scalar_select %p43, %s45, %s27
      %p47 = scmp.ge.s32.totalorder %s46, 1
      %s48 = scalar_select %p47, 0, %s46
      %s49 = sadd.s32 1, %s26
      %s50 = scalar_select %p47, %s49, %s26
      %p51 = scmp.ge.s32.totalorder %s50, 2
      %s52 = scalar_select %p51, 0, %s50
      %s53 = ssub.s32 %s26, %s52
      %s54 = ssub.s32 %s27, %s48
      %s55 = sor.u32 %s53, %s54
      %s56 = ssub.s32 %s28, %s44
      %s57 = sor.u32 %s55, %s56
      %p58 = scmp.eq.s32.totalorder %s57, 0
      %s60 = sadd.s32 %s59, 1
      %s61 = scalar_select %p58, %s59, %s60
      %p64 = pneg %p58
      %p65 = scmp.eq.s32.totalorder %s19, 1
      %p66 = por %p64, %p65
      %p67 = scmp.ne.s32.totalorder %s59, %s62
      %p68 = scmp.eq.s32.totalorder %s19, 0
      %p69 = por %p67, %p68
      %p70 = scmp.ne.s32.totalorder %s59, %s62
      %p71 = scmp.eq.s32.totalorder %s24, 1
      %p72 = por %p70, %p71
      %p73 = scmp.ne.s32.totalorder %s62, %s63
      %p74 = scmp.eq.s32.totalorder %s24, 0
      %p75 = por %p73, %p74
      %p76 = scmp.ne.s32.totalorder %s62, %s63
      %p77 = scmp.eq.s32.totalorder %s25, 1
      %p78 = por %p76, %p77
      %p80 = scmp.ne.s32.totalorder %s63, %s79
      %p81 = scmp.eq.s32.totalorder %s25, 0
      %p82 = por %p80, %p81
      %s83 = ssub.s32 %s26, %s52
      %s84 = ssub.s32 %s27, %s48
      %s85 = sor.u32 %s83, %s84
      %s86 = ssub.s32 %s29, %s40
      %s87 = sor.u32 %s85, %s86
      %p88 = scmp.eq.s32.totalorder %s87, 0
      %s90 = sadd.s32 %s89, 1
      %s91 = scalar_select %p88, %s89, %s90
      %p94 = pneg %p88
      %p95 = scmp.eq.s32.totalorder %s19, 1
      %p96 = por %p94, %p95
      %p97 = scmp.ne.s32.totalorder %s89, %s92
      %p98 = scmp.eq.s32.totalorder %s19, 0
      %p99 = por %p97, %p98
      %p100 = scmp.ne.s32.totalorder %s89, %s92
      %p101 = scmp.eq.s32.totalorder %s24, 1
      %p102 = por %p100, %p101
      %p103 = scmp.ne.s32.totalorder %s92, %s93
      %p104 = scmp.eq.s32.totalorder %s24, 0
      %p105 = por %p103, %p104
      %p106 = scmp.ne.s32.totalorder %s92, %s93
      %p107 = scmp.eq.s32.totalorder %s25, 1
      %p108 = por %p106, %p107
      %p110 = scmp.ne.s32.totalorder %s93, %s109
      %p111 = scmp.eq.s32.totalorder %s25, 0
      %p112 = por %p110, %p111
      %s113 = ssub.s32 %s26, %s52
      %s114 = ssub.s32 %s27, %s48
      %s115 = sor.u32 %s113, %s114
      %s116 = ssub.s32 %s29, %s40
      %s117 = sor.u32 %s115, %s116
      %p118 = scmp.eq.s32.totalorder %s117, 0
      %s120 = sadd.s32 %s119, 1
      %s121 = scalar_select %p118, %s119, %s120
      %p124 = pneg %p118
      %p125 = scmp.eq.s32.totalorder %s19, 1
      %p126 = por %p124, %p125
      %p127 = scmp.ne.s32.totalorder %s119, %s122
      %p128 = scmp.eq.s32.totalorder %s19, 0
      %p129 = por %p127, %p128
      %p130 = scmp.ne.s32.totalorder %s119, %s122
      %p131 = scmp.eq.s32.totalorder %s24, 1
      %p132 = por %p130, %p131
      %p133 = scmp.ne.s32.totalorder %s122, %s123
      %p134 = scmp.eq.s32.totalorder %s24, 0
      %p135 = por %p133, %p134
      %p136 = scmp.ne.s32.totalorder %s122, %s123
      %p137 = scmp.eq.s32.totalorder %s25, 1
      %p138 = por %p136, %p137
      %p140 = scmp.ne.s32.totalorder %s123, %s139
      %p141 = scmp.eq.s32.totalorder %s25, 0
      %p142 = por %p140, %p141
      %s143 = ssub.s32 %s26, %s52
      %s144 = ssub.s32 %s29, %s40
      %s145 = sor.u32 %s143, %s144
      %p146 = scmp.eq.s32.totalorder %s145, 0
      %s148 = sadd.s32 %s147, 1
      %s149 = scalar_select %p146, %s147, %s148
      %p152 = pneg %p146
      %p153 = scmp.eq.s32.totalorder %s19, 1
      %p154 = por %p152, %p153
      %p155 = scmp.ne.s32.totalorder %s147, %s150
      %p156 = scmp.eq.s32.totalorder %s19, 0
      %p157 = por %p155, %p156
      %p158 = scmp.ne.s32.totalorder %s147, %s150
      %p159 = scmp.eq.s32.totalorder %s24, 1
      %p160 = por %p158, %p159
      %p161 = scmp.ne.s32.totalorder %s150, %s151
      %p162 = scmp.eq.s32.totalorder %s24, 0
      %p163 = por %p161, %p162
      %p164 = scmp.ne.s32.totalorder %s150, %s151
      %p165 = scmp.eq.s32.totalorder %s25, 1
      %p166 = por %p164, %p165
      %p168 = scmp.ne.s32.totalorder %s151, %s167
      %p169 = scmp.eq.s32.totalorder %s25, 0
      %p170 = por %p168, %p169
      %s171 = ssub.s32 %s26, %s52
      %s172 = ssub.s32 %s28, %s44
      %s173 = sor.u32 %s171, %s172
      %s174 = ssub.s32 %s27, %s48
      %s175 = sor.u32 %s173, %s174
      %p176 = scmp.eq.s32.totalorder %s175, 0
      %s178 = sadd.s32 %s177, 1
      %s179 = scalar_select %p176, %s177, %s178
      %p182 = pneg %p176
      %p183 = scmp.eq.s32.totalorder %s19, 1
      %p184 = por %p182, %p183
      %p185 = scmp.ne.s32.totalorder %s177, %s180
      %p186 = scmp.eq.s32.totalorder %s19, 0
      %p187 = por %p185, %p186
      %p188 = scmp.ne.s32.totalorder %s177, %s180
      %p189 = scmp.eq.s32.totalorder %s24, 1
      %p190 = por %p188, %p189
      %p191 = scmp.ne.s32.totalorder %s180, %s181
      %p192 = scmp.eq.s32.totalorder %s24, 0
      %p193 = por %p191, %p192
      %p194 = scmp.ne.s32.totalorder %s180, %s181
      %p195 = scmp.eq.s32.totalorder %s25, 1
      %p196 = por %p194, %p195
      %p198 = scmp.ne.s32.totalorder %s181, %s197
      %p199 = scmp.eq.s32.totalorder %s25, 0
      %p200 = por %p198, %p199
      %p201 = scmp.le.s32.totalorder 1, %s19
      %p202 = scmp.lt.s32.totalorder %s19, 3
      %p203 = pnand %p201, %p202
      %p204 = pneg %p203
      // Predicated region
      $region9: #{tpu_custom_call.1} parent=5 // pred_check
        _
      $region10: #{tpu_custom_call.1} parent=5 // pred_check_branch
        %206 = sbr.rel (%p203) target = $region12
      $region11: #{tpu_custom_call.1} parent=5 // pred_region
        %s207 = ssub.s32 %s19, 1
      $region12: #{tpu_custom_call.1} parent=5 // pred_fallthru
        _
      %p208 = scmp.lt.s32.totalorder %s19, 2
      // Predicated region
      $region13: #{tpu_custom_call.1} parent=5 // pred_check
        %p209 = pneg %p208
      $region14: #{tpu_custom_call.1} parent=5 // pred_check_branch
        %211 = sbr.rel (%p209) target = $region16
      $region15: #{tpu_custom_call.1} parent=5 // pred_region
        // Predicated region
        $region17: #{tpu_custom_call.1} parent=15 // pred_check
          %p212 = pneg %p69
        $region18: #{tpu_custom_call.1} parent=15 // pred_check_branch
          %214 = sbr.rel (%p212) target = $region20
        $region19: #{tpu_custom_call.1} parent=15 // pred_region
          %s215 = sand.u32 %s59, 1
          %s216 = scalar_lea.sflag [#allocation6], %s215
          %s217 = sand.u32 %s59, 1
          %s218 = smul.addr %s217, 32
          %s219 = scalar_lea.vmem [#allocation5], %s218
          %s220 = smul.u32 4, %s27
          %s222 = ssub.s32 512, 512
          %223 = vsyncadd %s216, %s222
          %s224 = sadd.s32 %s28, %s220
          %s225 = smul.addr %s26, 4
          %s226 = sadd.s32 %s224, %s225
          %s227 = smul.addr %s226, 128
          %s228 = scalar_lea.hbm %s0, %s227
          %s229 = sshll.u32 %s219, 4
          %s230 = int_to_ptr.vmem [resolvable:$true] %s229
          %235 = dma.hbm_to_vmem [thread:$0]  %s228, 512, %s230, %s216, 128, 128, 8
        $region20: #{tpu_custom_call.1} parent=15 // pred_fallthru
          _
        // Predicated region
        $region21: #{tpu_custom_call.1} parent=15 // pred_check
          %p236 = pneg %p99
        $region22: #{tpu_custom_call.1} parent=15 // pred_check_branch
          %238 = sbr.rel (%p236) target = $region24
        $region23: #{tpu_custom_call.1} parent=15 // pred_region
          %s239 = sand.u32 %s19, 1
          %s240 = scalar_lea.sflag [#allocation9], %s239
          %s241 = sand.u32 %s89, 1
          %s242 = smul.addr %s241, 32
          %s243 = scalar_lea.vmem [#allocation8], %s242
          %s244 = smul.u32 4, %s27
          %s246 = ssub.s32 512, 512
          %247 = vsyncadd %s240, %s246
          %s248 = sadd.s32 %s29, %s244
          %s249 = smul.addr %s26, 4
          %s250 = sadd.s32 %s248, %s249
          %s251 = smul.addr %s250, 128
          %s252 = scalar_lea.hbm %s1, %s251
          %s253 = sshll.u32 %s243, 4
          %s254 = int_to_ptr.vmem [resolvable:$true] %s253
          %259 = dma.hbm_to_vmem [thread:$0]  %s252, 512, %s254, %s240, 128, 128, 8
        $region24: #{tpu_custom_call.1} parent=15 // pred_fallthru
          _
        // Predicated region
        $region25: #{tpu_custom_call.1} parent=15 // pred_check
          %p260 = pneg %p129
        $region26: #{tpu_custom_call.1} parent=15 // pred_check_branch
          %262 = sbr.rel (%p260) target = $region28
        $region27: #{tpu_custom_call.1} parent=15 // pred_region
          %s263 = sand.u32 %s19, 1
          %s264 = scalar_lea.sflag [#allocation9], %s263
          %s265 = sand.u32 %s119, 1
          %s266 = smul.addr %s265, 32
          %s267 = scalar_lea.vmem [#allocation10], %s266
          %s268 = smul.u32 4, %s27
          %s270 = ssub.s32 512, 512
          %271 = vsyncadd %s264, %s270
          %s272 = sadd.s32 %s29, %s268
          %s273 = smul.addr %s26, 4
          %s274 = sadd.s32 %s272, %s273
          %s275 = smul.addr %s274, 128
          %s276 = scalar_lea.hbm %s2, %s275
          %s277 = sshll.u32 %s267, 4
          %s278 = int_to_ptr.vmem [resolvable:$true] %s277
          %283 = dma.hbm_to_vmem [thread:$0]  %s276, 512, %s278, %s264, 128, 128, 8
        $region28: #{tpu_custom_call.1} parent=15 // pred_fallthru
          _
        // Predicated region
        $region29: #{tpu_custom_call.1} parent=15 // pred_check
          %p284 = pneg %p157
        $region30: #{tpu_custom_call.1} parent=15 // pred_check_branch
          %286 = sbr.rel (%p284) target = $region32
        $region31: #{tpu_custom_call.1} parent=15 // pred_region
          %p287 = scmp.lt.s32.totalorder %s26, 1
          %s288 = scalar_select %p287, %s26, 1
          %p289 = scmp.lt.s32.totalorder %s29, 0
          %s290 = scalar_select %p289, %s29, 0
          %s291 = sadd.s32 %s290, %s288
          %s292 = scalar_lea.vmem %s3, %s291
        $region32: #{tpu_custom_call.1} parent=15 // pred_fallthru
          _
      $region16: #{tpu_custom_call.1} parent=5 // pred_fallthru
        _
      %p293 = scmp.le.s32.totalorder 1, %s19
      %p294 = scmp.lt.s32.totalorder %s19, 3
      %p295 = pnand %p293, %p294
      %p296 = pneg %p295
      // Predicated region
      $region33: #{tpu_custom_call.1} parent=5 // pred_check
        _
      $region34: #{tpu_custom_call.1} parent=5 // pred_check_branch
        %298 = sbr.rel (%p295) target = $region36
      $region35: #{tpu_custom_call.1} parent=5 // pred_region
        %s299 = ssub.s32 %s19, 1
        %s300 = sand.u32 %s62, 1
        %s301 = scalar_lea.sflag [#allocation6], %s300
        %s302 = sand.u32 %s62, 1
        %s303 = smul.addr %s302, 32
        %s304 = scalar_lea.vmem [#allocation5], %s303
        // Predicated region
        $region37: #{tpu_custom_call.1} parent=35 // pred_check
          %p305 = pneg %p75
        $region38: #{tpu_custom_call.1} parent=35 // pred_check_branch
          %307 = sbr.rel (%p305) target = $region40
        $region39: #{tpu_custom_call.1} parent=35 // pred_region
          %308 = dma.done %s301, 512
        $region40: #{tpu_custom_call.1} parent=35 // pred_fallthru
          _
        %s309 = sand.u32 %s24, 1
        %s310 = scalar_lea.sflag [#allocation9], %s309
        %s311 = sand.u32 %s92, 1
        %s312 = smul.addr %s311, 32
        %s313 = scalar_lea.vmem [#allocation8], %s312
        // Predicated region
        $region41: #{tpu_custom_call.1} parent=35 // pred_check
          %p314 = pneg %p105
        $region42: #{tpu_custom_call.1} parent=35 // pred_check_branch
          %316 = sbr.rel (%p314) target = $region44
        $region43: #{tpu_custom_call.1} parent=35 // pred_region
          %317 = dma.done %s310, 512
        $region44: #{tpu_custom_call.1} parent=35 // pred_fallthru
          _
        %s318 = sand.u32 %s24, 1
        %s319 = scalar_lea.sflag [#allocation9], %s318
        %s320 = sand.u32 %s122, 1
        %s321 = smul.addr %s320, 32
        %s322 = scalar_lea.vmem [#allocation10], %s321
        // Predicated region
        $region45: #{tpu_custom_call.1} parent=35 // pred_check
          %p323 = pneg %p135
        $region46: #{tpu_custom_call.1} parent=35 // pred_check_branch
          %325 = sbr.rel (%p323) target = $region48
        $region47: #{tpu_custom_call.1} parent=35 // pred_region
          %326 = dma.done %s319, 512
        $region48: #{tpu_custom_call.1} parent=35 // pred_fallthru
          _
        %s327 = sand.u32 %s62, 1
        %s328 = scalar_lea.sflag [#allocation6], %s327
        %s329 = sand.u32 %s62, 1
        %s330 = smul.addr %s329, 32
        %s331 = scalar_lea.vmem [#allocation5], %s330
        %p332 = pneg %p75
        %p333 = pneg %p72
        %s334 = sand.u32 %s24, 1
        %s335 = scalar_lea.sflag [#allocation9], %s334
        %s336 = sand.u32 %s92, 1
        %s337 = smul.addr %s336, 32
        %s338 = scalar_lea.vmem [#allocation8], %s337
        %p339 = pneg %p105
        %p340 = pneg %p102
        %s341 = sand.u32 %s24, 1
        %s342 = scalar_lea.sflag [#allocation9], %s341
        %s343 = sand.u32 %s122, 1
        %s344 = smul.addr %s343, 32
        %s345 = scalar_lea.vmem [#allocation10], %s344
        %p346 = pneg %p135
        %p347 = pneg %p132
        %p348 = scmp.lt.s32.totalorder %s30, 1
        %s349 = scalar_select %p348, %s30, 1
        %p350 = scmp.lt.s32.totalorder %s33, 0
        %s351 = scalar_select %p350, %s33, 0
        %s352 = sadd.s32 %s351, %s349
        %s353 = scalar_lea.vmem %s3, %s352
        %p354 = pneg %p163
        %p355 = pneg %p160
        %p356 = pneg %p193
        %p357 = pneg %p190
        %s358 = sand.u32 %s180, 1
        %s359 = scalar_lea.sflag [#allocation7], %s358
        %s360 = sand.u32 %s180, 1
        %s361 = smul.addr %s360, 8
        %s362 = scalar_lea.vmem [#allocation11], %s361
        %s363 = smul.u32 4, %s31
        %s364 = smul.u32 4, %s31
        %s365 = smul.u32 4, %s31
        %p366 = scmp.lt.s32.totalorder %s30, 1
        %s367 = scalar_select %p366, %s30, 1
        %p368 = scmp.lt.s32.totalorder %s33, 0
        %s369 = scalar_select %p368, %s33, 0
        %s370 = sadd.s32 %s369, %s367
        %s371 = scalar_lea.vmem %s3, %s370
        %s372 = smul.u32 %s32, 8
        %s373 = smul.u32 %s33, 8
        %p374 = scmp.eq.s32.totalorder %s33, 0
        // Predicated region
        $region49: #{tpu_custom_call.1} parent=35 // pred_check
          %p375 = pneg %p374
        $region50: #{tpu_custom_call.1} parent=35 // pred_check_branch
          %377 = sbr.rel (%p375) target = $region52
        $region51: #{tpu_custom_call.1} parent=35 // pred_region
          %vm378 = vcmask 7168
          %379 = vst.msk [vmem:[#allocation2] sm:$0xff] %vm378, -inf
          %380 = vst.msk [vmem:[#allocation2 + $0x8] sm:$0xff] %vm378, -inf
          %381 = vst.msk [vmem:[#allocation2 + $0x10] sm:$0xff] %vm378, -inf
          %382 = vst.msk [vmem:[#allocation2 + $0x18] sm:$0xff] %vm378, -inf
          %383 = vst.msk [vmem:[#allocation3] sm:$0xff] %vm378, 0.0
          %384 = vst.msk [vmem:[#allocation3 + $0x8] sm:$0xff] %vm378, 0.0
          %385 = vst.msk [vmem:[#allocation3 + $0x10] sm:$0xff] %vm378, 0.0
          %386 = vst.msk [vmem:[#allocation3 + $0x18] sm:$0xff] %vm378, 0.0
          %387 = vst [vmem:[#allocation4] sm:$0xff] 0.0
        $region52: #{tpu_custom_call.1} parent=35 // pred_fallthru
          _
        %s388 = sadd.s32 %s372, 7
        %p389 = scmp.le.s32.totalorder %s373, %s388
        // Predicated region
        $region53: #{tpu_custom_call.1} parent=35 // pred_check
          %p390 = pneg %p389
        $region54: #{tpu_custom_call.1} parent=35 // pred_check_branch
          %392 = sbr.rel (%p390) target = $region56
        $region55: #{tpu_custom_call.1} parent=35 // pred_region
          %v393 = vlaneseq
          %v394 = vshrl.u32 %v393, 7
          %v395 = vstv %s372
          %v396 = vadd.s32 %v395, %v394
          %v397 = vlaneseq
          %v398 = vand.u32 %v397, 127
          %v399 = vstv %s373
          %v400 = vadd.s32 %v399, %v398
          %vm401 = vcmp.ge.s32.totalorder %v396, %v400
          %v402 = vld [vmem:[%s371] sm:$0x1]
          %v403 = vld [vmem:[%s304] sm:$0xff]
          %v404 = vld [vmem:[%s313] sm:$0xff]
          %v405 = vld [vmem:[%s322] sm:$0xff]
          %vm406 = vcmask 261120
          %v408 = vsel %vm406, %v403, 0
          %v411 = vsel %vm406, %v404, 0
          %413 = vmatprep.subr.mxu0 0.0
          %414 = vmatpush1.xpose.msra.mxu0 %v411
          %415 = vmatprep.subr.mxu0 0.0
          %416 = vmatpush1.xpose.msra.mxu0 0.0
          %417 = vmatprep.subr.mxu0 0.0
          %418 = vmatpush1.xpose.msra.mxu0 0.0
          %419 = vmatprep.subr.mxu0 0.0
          %420 = vmatpush1.xpose.msra.mxu0 0.0
          %421 = vmatprep.subr.mxu0 0.0
          %422 = vmatpush1.xpose.msra.mxu0 0.0
          %423 = vmatprep.subr.mxu0 0.0
          %424 = vmatpush1.xpose.msra.mxu0 0.0
          %425 = vmatprep.subr.mxu0 0.0
          %426 = vmatpush1.xpose.msra.mxu0 0.0
          %427 = vmatprep.subr.mxu0 0.0
          %428 = vmatpush1.xpose.msra.mxu0 0.0
          %429 = vmatprep.subr.mxu0 0.0
          %430 = vmatpush1.xpose.msra.mxu0 0.0
          %431 = vmatprep.subr.mxu0 0.0
          %432 = vmatpush1.xpose.msra.mxu0 0.0
          %433 = vmatprep.subr.mxu0 0.0
          %434 = vmatpush1.xpose.msra.mxu0 0.0
          %435 = vmatprep.subr.mxu0 0.0
          %436 = vmatpush1.xpose.msra.mxu0 0.0
          %437 = vmatprep.subr.mxu0 0.0
          %438 = vmatpush1.xpose.msra.mxu0 0.0
          %439 = vmatprep.subr.mxu0 0.0
          %440 = vmatpush1.xpose.msra.mxu0 0.0
          %441 = vmatprep.subr.mxu0 0.0
          %442 = vmatpush1.xpose.msra.mxu0 0.0
          %443 = vmatprep.subr.mxu0 0.0
          %444 = vmatpush1.xpose.msra.mxu0 0.0
          %445 = vmatprep.subr.mxu0 0.0
          %446 = vmatpush1.xpose.msra.mxu0 0.0
          %447 = vmatprep.subr.mxu0 0.0
          %448 = vmatpush1.xpose.msra.mxu0 0.0
          %449 = vmatprep.subr.mxu0 0.0
          %450 = vmatpush1.xpose.msra.mxu0 0.0
          %451 = vmatprep.subr.mxu0 0.0
          %452 = vmatpush1.xpose.msra.mxu0 0.0
          %453 = vmatprep.subr.mxu0 0.0
          %454 = vmatpush1.xpose.msra.mxu0 0.0
          %455 = vmatprep.subr.mxu0 0.0
          %456 = vmatpush1.xpose.msra.mxu0 0.0
          %457 = vmatprep.subr.mxu0 0.0
          %458 = vmatpush1.xpose.msra.mxu0 0.0
          %459 = vmatprep.subr.mxu0 0.0
          %460 = vmatpush1.xpose.msra.mxu0 0.0
          %461 = vmatprep.subr.mxu0 0.0
          %462 = vmatpush1.xpose.msra.mxu0 0.0
          %463 = vmatprep.subr.mxu0 0.0
          %464 = vmatpush1.xpose.msra.mxu0 0.0
          %465 = vmatprep.subr.mxu0 0.0
          %466 = vmatpush1.xpose.msra.mxu0 0.0
          %467 = vmatprep.subr.mxu0 0.0
          %468 = vmatpush1.xpose.msra.mxu0 0.0
          %469 = vmatprep.subr.mxu0 0.0
          %470 = vmatpush1.xpose.msra.mxu0 0.0
          %471 = vmatprep.subr.mxu0 0.0
          %472 = vmatpush1.xpose.msra.mxu0 0.0
          %473 = vmatprep.subr.mxu0 0.0
          %474 = vmatpush1.xpose.msra.mxu0 0.0
          %475 = vmatprep.subr.mxu0 0.0
          %476 = vmatpush1.xpose.msra.mxu0 0.0
          %477 = vmatprep.mubr.f32.mxu0 0.0
          %478 = vmatmul.mubr.f32.gmra.mrb[0].mxu0 %v408
          %v479 = vpop.f32.mrb[0].mxu0
          %v480 = vadd.f32 0.0, %v479
          %v481 = vpop.f32.mrb[0].mxu0
          %482 = vdwg.mxu0
          %v483 = vmul.f32 %v480, 0.17677669
          %v484 = vsel %vm401, %v483, -10000.0
          %v486 = vlaneseq
          %v487 = vshrl.u32 %v486, 7
          %v488 = vsub.s32 0, %v487
          %v489 = vrot.slane %v402, %v488
          %v491 = vadd.f32 %v484, %v489
          %v492 = vld [vmem:[#allocation2] sm:$0xff]
          %vm493 = vcmask 64512
          %v494 = vsel %vm493, %v491, -inf
          %495 = vmax.xlane.f32.xlu0 %v494
          %v496 = vpop.xlane.xlu0 %495
          %v497 = vmax.f32 %v492, %v496
          %v498 = vsub.f32 %v492, %v497
          %v499 = vmul.f32 %v498, 1.442695
          %v500 = vpow.pop %v499
          %502 = vset.pattern.permute.xlu0 0
          %503 = vperm.xlu0 %502, %v497
          %v504 = vpop.permute.xlu0 %503
          %v506 = vsub.f32 %v491, %v504
          %v507 = vmul.f32 %v506, 1.442695
          %v508 = vpow.pop %v507
          %v509 = vld [vmem:[#allocation3] sm:$0xff]
          %v510 = vmul.f32 %v500, %v509
          %v511 = vsel %vm493, %v508, 0.0
          %512 = vadd.xlane.f32.xlu0 %v511
          %v513 = vpop.xlane.xlu0 %512
          %v514 = vadd.f32 %v510, %v513
          %vm515 = vcmask 7168
          %516 = vst.msk [vmem:[#allocation3] sm:$0xff] %vm515, %v514
          %v518 = vsel %vm493, %v508, 0
          %520 = vmatprep.subr.mxu0 0.0
          %521 = vmatpush1.msra.mxu0 %v405
          %522 = vmatprep.subr.mxu0 0.0
          %523 = vmatpush1.msra.mxu0 0.0
          %524 = vmatprep.subr.mxu0 0.0
          %525 = vmatpush1.msra.mxu0 0.0
          %526 = vmatprep.subr.mxu0 0.0
          %527 = vmatpush1.msra.mxu0 0.0
          %528 = vmatprep.subr.mxu0 0.0
          %529 = vmatpush1.msra.mxu0 0.0
          %530 = vmatprep.subr.mxu0 0.0
          %531 = vmatpush1.msra.mxu0 0.0
          %532 = vmatprep.subr.mxu0 0.0
          %533 = vmatpush1.msra.mxu0 0.0
          %534 = vmatprep.subr.mxu0 0.0
          %535 = vmatpush1.msra.mxu0 0.0
          %536 = vmatprep.subr.mxu0 0.0
          %537 = vmatpush1.msra.mxu0 0.0
          %538 = vmatprep.subr.mxu0 0.0
          %539 = vmatpush1.msra.mxu0 0.0
          %540 = vmatprep.subr.mxu0 0.0
          %541 = vmatpush1.msra.mxu0 0.0
          %542 = vmatprep.subr.mxu0 0.0
          %543 = vmatpush1.msra.mxu0 0.0
          %544 = vmatprep.subr.mxu0 0.0
          %545 = vmatpush1.msra.mxu0 0.0
          %546 = vmatprep.subr.mxu0 0.0
          %547 = vmatpush1.msra.mxu0 0.0
          %548 = vmatprep.subr.mxu0 0.0
          %549 = vmatpush1.msra.mxu0 0.0
          %550 = vmatprep.subr.mxu0 0.0
          %551 = vmatpush1.msra.mxu0 0.0
          %552 = vmatprep.subr.mxu0 0.0
          %553 = vmatpush1.msra.mxu0 0.0
          %554 = vmatprep.subr.mxu0 0.0
          %555 = vmatpush1.msra.mxu0 0.0
          %556 = vmatprep.subr.mxu0 0.0
          %557 = vmatpush1.msra.mxu0 0.0
          %558 = vmatprep.subr.mxu0 0.0
          %559 = vmatpush1.msra.mxu0 0.0
          %560 = vmatprep.subr.mxu0 0.0
          %561 = vmatpush1.msra.mxu0 0.0
          %562 = vmatprep.subr.mxu0 0.0
          %563 = vmatpush1.msra.mxu0 0.0
          %564 = vmatprep.subr.mxu0 0.0
          %565 = vmatpush1.msra.mxu0 0.0
          %566 = vmatprep.subr.mxu0 0.0
          %567 = vmatpush1.msra.mxu0 0.0
          %568 = vmatprep.subr.mxu0 0.0
          %569 = vmatpush1.msra.mxu0 0.0
          %570 = vmatprep.subr.mxu0 0.0
          %571 = vmatpush1.msra.mxu0 0.0
          %572 = vmatprep.subr.mxu0 0.0
          %573 = vmatpush1.msra.mxu0 0.0
          %574 = vmatprep.subr.mxu0 0.0
          %575 = vmatpush1.msra.mxu0 0.0
          %576 = vmatprep.subr.mxu0 0.0
          %577 = vmatpush1.msra.mxu0 0.0
          %578 = vmatprep.subr.mxu0 0.0
          %579 = vmatpush1.msra.mxu0 0.0
          %580 = vmatprep.subr.mxu0 0.0
          %581 = vmatpush1.msra.mxu0 0.0
          %582 = vmatprep.subr.mxu0 0.0
          %583 = vmatpush1.msra.mxu0 0.0
          %584 = vmatprep.mubr.f32.mxu0 0.0
          %585 = vmatmul.mubr.f32.gmra.mrb[0].mxu0 %v518
          %v586 = vpop.f32.mrb[0].mxu0
          %v587 = vadd.f32 0.0, %v586
          %v588 = vpop.f32.mrb[0].mxu0
          %589 = vdwg.mxu0
          %v590 = vld [vmem:[#allocation4] sm:$0xff]
          %592 = vset.pattern.permute.xlu0 0
          %593 = vperm.xlu0 %592, %v500
          %v594 = vpop.permute.xlu0 %593
          %v596 = vmul.f32 %v594, %v590
          %v597 = vadd.f32 %v596, %v587
          %598 = vst.msk [vmem:[#allocation4] sm:$0xff] %vm406, %v597
          %599 = vst.msk [vmem:[#allocation2] sm:$0xff] %vm515, %v497
          %s600 = scalar_lea.vmem %s304, 8 [#allocation5]
          %v601 = vld [vmem:[%s600] sm:$0xff]
          %s602 = scalar_lea.vmem %s313, 8 [#allocation8]
          %v603 = vld [vmem:[%s602] sm:$0xff]
          %s604 = scalar_lea.vmem %s322, 8 [#allocation10]
          %v605 = vld [vmem:[%s604] sm:$0xff]
          %v607 = vsel %vm406, %v601, 0
          %v610 = vsel %vm406, %v603, 0
          %612 = vmatprep.subr.mxu0 0.0
          %613 = vmatpush1.xpose.msra.mxu0 %v610
          %614 = vmatprep.subr.mxu0 0.0
          %615 = vmatpush1.xpose.msra.mxu0 0.0
          %616 = vmatprep.subr.mxu0 0.0
          %617 = vmatpush1.xpose.msra.mxu0 0.0
          %618 = vmatprep.subr.mxu0 0.0
          %619 = vmatpush1.xpose.msra.mxu0 0.0
          %620 = vmatprep.subr.mxu0 0.0
          %621 = vmatpush1.xpose.msra.mxu0 0.0
          %622 = vmatprep.subr.mxu0 0.0
          %623 = vmatpush1.xpose.msra.mxu0 0.0
          %624 = vmatprep.subr.mxu0 0.0
          %625 = vmatpush1.xpose.msra.mxu0 0.0
          %626 = vmatprep.subr.mxu0 0.0
          %627 = vmatpush1.xpose.msra.mxu0 0.0
          %628 = vmatprep.subr.mxu0 0.0
          %629 = vmatpush1.xpose.msra.mxu0 0.0
          %630 = vmatprep.subr.mxu0 0.0
          %631 = vmatpush1.xpose.msra.mxu0 0.0
          %632 = vmatprep.subr.mxu0 0.0
          %633 = vmatpush1.xpose.msra.mxu0 0.0
          %634 = vmatprep.subr.mxu0 0.0
          %635 = vmatpush1.xpose.msra.mxu0 0.0
          %636 = vmatprep.subr.mxu0 0.0
          %637 = vmatpush1.xpose.msra.mxu0 0.0
          %638 = vmatprep.subr.mxu0 0.0
          %639 = vmatpush1.xpose.msra.mxu0 0.0
          %640 = vmatprep.subr.mxu0 0.0
          %641 = vmatpush1.xpose.msra.mxu0 0.0
          %642 = vmatprep.subr.mxu0 0.0
          %643 = vmatpush1.xpose.msra.mxu0 0.0
          %644 = vmatprep.subr.mxu0 0.0
          %645 = vmatpush1.xpose.msra.mxu0 0.0
          %646 = vmatprep.subr.mxu0 0.0
          %647 = vmatpush1.xpose.msra.mxu0 0.0
          %648 = vmatprep.subr.mxu0 0.0
          %649 = vmatpush1.xpose.msra.mxu0 0.0
          %650 = vmatprep.subr.mxu0 0.0
          %651 = vmatpush1.xpose.msra.mxu0 0.0
          %652 = vmatprep.subr.mxu0 0.0
          %653 = vmatpush1.xpose.msra.mxu0 0.0
          %654 = vmatprep.subr.mxu0 0.0
          %655 = vmatpush1.xpose.msra.mxu0 0.0
          %656 = vmatprep.subr.mxu0 0.0
          %657 = vmatpush1.xpose.msra.mxu0 0.0
          %658 = vmatprep.subr.mxu0 0.0
          %659 = vmatpush1.xpose.msra.mxu0 0.0
          %660 = vmatprep.subr.mxu0 0.0
          %661 = vmatpush1.xpose.msra.mxu0 0.0
          %662 = vmatprep.subr.mxu0 0.0
          %663 = vmatpush1.xpose.msra.mxu0 0.0
          %664 = vmatprep.subr.mxu0 0.0
          %665 = vmatpush1.xpose.msra.mxu0 0.0
          %666 = vmatprep.subr.mxu0 0.0
          %667 = vmatpush1.xpose.msra.mxu0 0.0
          %668 = vmatprep.subr.mxu0 0.0
          %669 = vmatpush1.xpose.msra.mxu0 0.0
          %670 = vmatprep.subr.mxu0 0.0
          %671 = vmatpush1.xpose.msra.mxu0 0.0
          %672 = vmatprep.subr.mxu0 0.0
          %673 = vmatpush1.xpose.msra.mxu0 0.0
          %674 = vmatprep.subr.mxu0 0.0
          %675 = vmatpush1.xpose.msra.mxu0 0.0
          %676 = vmatprep.mubr.f32.mxu0 0.0
          %677 = vmatmul.mubr.f32.gmra.mrb[0].mxu0 %v607
          %v678 = vpop.f32.mrb[0].mxu0
          %v679 = vadd.f32 0.0, %v678
          %v680 = vpop.f32.mrb[0].mxu0
          %681 = vdwg.mxu0
          %v682 = vmul.f32 %v679, 0.17677669
          %v683 = vsel %vm401, %v682, -10000.0
          %v684 = vadd.f32 %v683, %v489
          %s685 = scalar_lea.vmem [#allocation2], 8
          %v686 = vld [vmem:[%s685] sm:$0xff]
          %v687 = vsel %vm493, %v684, -inf
          %688 = vmax.xlane.f32.xlu0 %v687
          %v689 = vpop.xlane.xlu0 %688
          %v690 = vmax.f32 %v686, %v689
          %v691 = vsub.f32 %v686, %v690
          %v692 = vmul.f32 %v691, 1.442695
          %v693 = vpow.pop %v692
          %695 = vset.pattern.permute.xlu0 0
          %696 = vperm.xlu0 %695, %v690
          %v697 = vpop.permute.xlu0 %696
          %v699 = vsub.f32 %v684, %v697
          %v700 = vmul.f32 %v699, 1.442695
          %v701 = vpow.pop %v700
          %s702 = scalar_lea.vmem [#allocation3], 8
          %v703 = vld [vmem:[%s702] sm:$0xff]
          %v704 = vmul.f32 %v693, %v703
          %v705 = vsel %vm493, %v701, 0.0
          %706 = vadd.xlane.f32.xlu0 %v705
          %v707 = vpop.xlane.xlu0 %706
          %v708 = vadd.f32 %v704, %v707
          %709 = vst.msk [vmem:[%s702] sm:$0xff] %vm515, %v708
          %v711 = vsel %vm493, %v701, 0
          %713 = vmatprep.subr.mxu0 0.0
          %714 = vmatpush1.msra.mxu0 %v605
          %715 = vmatprep.subr.mxu0 0.0
          %716 = vmatpush1.msra.mxu0 0.0
          %717 = vmatprep.subr.mxu0 0.0
          %718 = vmatpush1.msra.mxu0 0.0
          %719 = vmatprep.subr.mxu0 0.0
          %720 = vmatpush1.msra.mxu0 0.0
          %721 = vmatprep.subr.mxu0 0.0
          %722 = vmatpush1.msra.mxu0 0.0
          %723 = vmatprep.subr.mxu0 0.0
          %724 = vmatpush1.msra.mxu0 0.0
          %725 = vmatprep.subr.mxu0 0.0
          %726 = vmatpush1.msra.mxu0 0.0
          %727 = vmatprep.subr.mxu0 0.0
          %728 = vmatpush1.msra.mxu0 0.0
          %729 = vmatprep.subr.mxu0 0.0
          %730 = vmatpush1.msra.mxu0 0.0
          %731 = vmatprep.subr.mxu0 0.0
          %732 = vmatpush1.msra.mxu0 0.0
          %733 = vmatprep.subr.mxu0 0.0
          %734 = vmatpush1.msra.mxu0 0.0
          %735 = vmatprep.subr.mxu0 0.0
          %736 = vmatpush1.msra.mxu0 0.0
          %737 = vmatprep.subr.mxu0 0.0
          %738 = vmatpush1.msra.mxu0 0.0
          %739 = vmatprep.subr.mxu0 0.0
          %740 = vmatpush1.msra.mxu0 0.0
          %741 = vmatprep.subr.mxu0 0.0
          %742 = vmatpush1.msra.mxu0 0.0
          %743 = vmatprep.subr.mxu0 0.0
          %744 = vmatpush1.msra.mxu0 0.0
          %745 = vmatprep.subr.mxu0 0.0
          %746 = vmatpush1.msra.mxu0 0.0
          %747 = vmatprep.subr.mxu0 0.0
          %748 = vmatpush1.msra.mxu0 0.0
          %749 = vmatprep.subr.mxu0 0.0
          %750 = vmatpush1.msra.mxu0 0.0
          %751 = vmatprep.subr.mxu0 0.0
          %752 = vmatpush1.msra.mxu0 0.0
          %753 = vmatprep.subr.mxu0 0.0
          %754 = vmatpush1.msra.mxu0 0.0
          %755 = vmatprep.subr.mxu0 0.0
          %756 = vmatpush1.msra.mxu0 0.0
          %757 = vmatprep.subr.mxu0 0.0
          %758 = vmatpush1.msra.mxu0 0.0
          %759 = vmatprep.subr.mxu0 0.0
          %760 = vmatpush1.msra.mxu0 0.0
          %761 = vmatprep.subr.mxu0 0.0
          %762 = vmatpush1.msra.mxu0 0.0
          %763 = vmatprep.subr.mxu0 0.0
          %764 = vmatpush1.msra.mxu0 0.0
          %765 = vmatprep.subr.mxu0 0.0
          %766 = vmatpush1.msra.mxu0 0.0
          %767 = vmatprep.subr.mxu0 0.0
          %768 = vmatpush1.msra.mxu0 0.0
          %769 = vmatprep.subr.mxu0 0.0
          %770 = vmatpush1.msra.mxu0 0.0
          %771 = vmatprep.subr.mxu0 0.0
          %772 = vmatpush1.msra.mxu0 0.0
          %773 = vmatprep.subr.mxu0 0.0
          %774 = vmatpush1.msra.mxu0 0.0
          %775 = vmatprep.subr.mxu0 0.0
          %776 = vmatpush1.msra.mxu0 0.0
          %777 = vmatprep.mubr.f32.mxu0 0.0
          %778 = vmatmul.mubr.f32.gmra.mrb[0].mxu0 %v711
          %v779 = vpop.f32.mrb[0].mxu0
          %v780 = vadd.f32 0.0, %v779
          %v781 = vpop.f32.mrb[0].mxu0
          %782 = vdwg.mxu0
          %v783 = vld [vmem:[#allocation4] sm:$0xff]
          %785 = vset.pattern.permute.xlu0 0
          %786 = vperm.xlu0 %785, %v693
          %v787 = vpop.permute.xlu0 %786
          %v789 = vmul.f32 %v787, %v783
          %791 = vrot.lane.b32.xlu0 %v780, 32
          %v792 = vpop.permute.xlu0 %791
          %v794 = vadd.f32 %v789, %v792
          %vm795 = vcmask 523520
          %796 = vst.msk [vmem:[#allocation4] sm:$0xff] %vm795, %v794
          %797 = vst.msk [vmem:[%s685] sm:$0xff] %vm515, %v690
          %s798 = scalar_lea.vmem %s304, 16 [#allocation5]
          %v799 = vld [vmem:[%s798] sm:$0xff]
          %s800 = scalar_lea.vmem %s313, 16 [#allocation8]
          %v801 = vld [vmem:[%s800] sm:$0xff]
          %s802 = scalar_lea.vmem %s322, 16 [#allocation10]
          %v803 = vld [vmem:[%s802] sm:$0xff]
          %v805 = vsel %vm406, %v799, 0
          %v808 = vsel %vm406, %v801, 0
          %810 = vmatprep.subr.mxu0 0.0
          %811 = vmatpush1.xpose.msra.mxu0 %v808
          %812 = vmatprep.subr.mxu0 0.0
          %813 = vmatpush1.xpose.msra.mxu0 0.0
          %814 = vmatprep.subr.mxu0 0.0
          %815 = vmatpush1.xpose.msra.mxu0 0.0
          %816 = vmatprep.subr.mxu0 0.0
          %817 = vmatpush1.xpose.msra.mxu0 0.0
          %818 = vmatprep.subr.mxu0 0.0
          %819 = vmatpush1.xpose.msra.mxu0 0.0
          %820 = vmatprep.subr.mxu0 0.0
          %821 = vmatpush1.xpose.msra.mxu0 0.0
          %822 = vmatprep.subr.mxu0 0.0
          %823 = vmatpush1.xpose.msra.mxu0 0.0
          %824 = vmatprep.subr.mxu0 0.0
          %825 = vmatpush1.xpose.msra.mxu0 0.0
          %826 = vmatprep.subr.mxu0 0.0
          %827 = vmatpush1.xpose.msra.mxu0 0.0
          %828 = vmatprep.subr.mxu0 0.0
          %829 = vmatpush1.xpose.msra.mxu0 0.0
          %830 = vmatprep.subr.mxu0 0.0
          %831 = vmatpush1.xpose.msra.mxu0 0.0
          %832 = vmatprep.subr.mxu0 0.0
          %833 = vmatpush1.xpose.msra.mxu0 0.0
          %834 = vmatprep.subr.mxu0 0.0
          %835 = vmatpush1.xpose.msra.mxu0 0.0
          %836 = vmatprep.subr.mxu0 0.0
          %837 = vmatpush1.xpose.msra.mxu0 0.0
          %838 = vmatprep.subr.mxu0 0.0
          %839 = vmatpush1.xpose.msra.mxu0 0.0
          %840 = vmatprep.subr.mxu0 0.0
          %841 = vmatpush1.xpose.msra.mxu0 0.0
          %842 = vmatprep.subr.mxu0 0.0
          %843 = vmatpush1.xpose.msra.mxu0 0.0
          %844 = vmatprep.subr.mxu0 0.0
          %845 = vmatpush1.xpose.msra.mxu0 0.0
          %846 = vmatprep.subr.mxu0 0.0
          %847 = vmatpush1.xpose.msra.mxu0 0.0
          %848 = vmatprep.subr.mxu0 0.0
          %849 = vmatpush1.xpose.msra.mxu0 0.0
          %850 = vmatprep.subr.mxu0 0.0
          %851 = vmatpush1.xpose.msra.mxu0 0.0
          %852 = vmatprep.subr.mxu0 0.0
          %853 = vmatpush1.xpose.msra.mxu0 0.0
          %854 = vmatprep.subr.mxu0 0.0
          %855 = vmatpush1.xpose.msra.mxu0 0.0
          %856 = vmatprep.subr.mxu0 0.0
          %857 = vmatpush1.xpose.msra.mxu0 0.0
          %858 = vmatprep.subr.mxu0 0.0
          %859 = vmatpush1.xpose.msra.mxu0 0.0
          %860 = vmatprep.subr.mxu0 0.0
          %861 = vmatpush1.xpose.msra.mxu0 0.0
          %862 = vmatprep.subr.mxu0 0.0
          %863 = vmatpush1.xpose.msra.mxu0 0.0
          %864 = vmatprep.subr.mxu0 0.0
          %865 = vmatpush1.xpose.msra.mxu0 0.0
          %866 = vmatprep.subr.mxu0 0.0
          %867 = vmatpush1.xpose.msra.mxu0 0.0
          %868 = vmatprep.subr.mxu0 0.0
          %869 = vmatpush1.xpose.msra.mxu0 0.0
          %870 = vmatprep.subr.mxu0 0.0
          %871 = vmatpush1.xpose.msra.mxu0 0.0
          %872 = vmatprep.subr.mxu0 0.0
          %873 = vmatpush1.xpose.msra.mxu0 0.0
          %874 = vmatprep.mubr.f32.mxu0 0.0
          %875 = vmatmul.mubr.f32.gmra.mrb[0].mxu0 %v805
          %v876 = vpop.f32.mrb[0].mxu0
          %v877 = vadd.f32 0.0, %v876
          %v878 = vpop.f32.mrb[0].mxu0
          %879 = vdwg.mxu0
          %v880 = vmul.f32 %v877, 0.17677669
          %v881 = vsel %vm401, %v880, -10000.0
          %v882 = vadd.f32 %v881, %v489
          %s883 = scalar_lea.vmem [#allocation2], 16
          %v884 = vld [vmem:[%s883] sm:$0xff]
          %v885 = vsel %vm493, %v882, -inf
          %886 = vmax.xlane.f32.xlu0 %v885
          %v887 = vpop.xlane.xlu0 %886
          %v888 = vmax.f32 %v884, %v887
          %v889 = vsub.f32 %v884, %v888
          %v890 = vmul.f32 %v889, 1.442695
          %v891 = vpow.pop %v890
          %893 = vset.pattern.permute.xlu0 0
          %894 = vperm.xlu0 %893, %v888
          %v895 = vpop.permute.xlu0 %894
          %v897 = vsub.f32 %v882, %v895
          %v898 = vmul.f32 %v897, 1.442695
          %v899 = vpow.pop %v898
          %s900 = scalar_lea.vmem [#allocation3], 16
          %v901 = vld [vmem:[%s900] sm:$0xff]
          %v902 = vmul.f32 %v891, %v901
          %v903 = vsel %vm493, %v899, 0.0
          %904 = vadd.xlane.f32.xlu0 %v903
          %v905 = vpop.xlane.xlu0 %904
          %v906 = vadd.f32 %v902, %v905
          %907 = vst.msk [vmem:[%s900] sm:$0xff] %vm515, %v906
          %v909 = vsel %vm493, %v899, 0
          %911 = vmatprep.subr.mxu0 0.0
          %912 = vmatpush1.msra.mxu0 %v803
          %913 = vmatprep.subr.mxu0 0.0
          %914 = vmatpush1.msra.mxu0 0.0
          %915 = vmatprep.subr.mxu0 0.0
          %916 = vmatpush1.msra.mxu0 0.0
          %917 = vmatprep.subr.mxu0 0.0
          %918 = vmatpush1.msra.mxu0 0.0
          %919 = vmatprep.subr.mxu0 0.0
          %920 = vmatpush1.msra.mxu0 0.0
          %921 = vmatprep.subr.mxu0 0.0
          %922 = vmatpush1.msra.mxu0 0.0
          %923 = vmatprep.subr.mxu0 0.0
          %924 = vmatpush1.msra.mxu0 0.0
          %925 = vmatprep.subr.mxu0 0.0
          %926 = vmatpush1.msra.mxu0 0.0
          %927 = vmatprep.subr.mxu0 0.0
          %928 = vmatpush1.msra.mxu0 0.0
          %929 = vmatprep.subr.mxu0 0.0
          %930 = vmatpush1.msra.mxu0 0.0
          %931 = vmatprep.subr.mxu0 0.0
          %932 = vmatpush1.msra.mxu0 0.0
          %933 = vmatprep.subr.mxu0 0.0
          %934 = vmatpush1.msra.mxu0 0.0
          %935 = vmatprep.subr.mxu0 0.0
          %936 = vmatpush1.msra.mxu0 0.0
          %937 = vmatprep.subr.mxu0 0.0
          %938 = vmatpush1.msra.mxu0 0.0
          %939 = vmatprep.subr.mxu0 0.0
          %940 = vmatpush1.msra.mxu0 0.0
          %941 = vmatprep.subr.mxu0 0.0
          %942 = vmatpush1.msra.mxu0 0.0
          %943 = vmatprep.subr.mxu0 0.0
          %944 = vmatpush1.msra.mxu0 0.0
          %945 = vmatprep.subr.mxu0 0.0
          %946 = vmatpush1.msra.mxu0 0.0
          %947 = vmatprep.subr.mxu0 0.0
          %948 = vmatpush1.msra.mxu0 0.0
          %949 = vmatprep.subr.mxu0 0.0
          %950 = vmatpush1.msra.mxu0 0.0
          %951 = vmatprep.subr.mxu0 0.0
          %952 = vmatpush1.msra.mxu0 0.0
          %953 = vmatprep.subr.mxu0 0.0
          %954 = vmatpush1.msra.mxu0 0.0
          %955 = vmatprep.subr.mxu0 0.0
          %956 = vmatpush1.msra.mxu0 0.0
          %957 = vmatprep.subr.mxu0 0.0
          %958 = vmatpush1.msra.mxu0 0.0
          %959 = vmatprep.subr.mxu0 0.0
          %960 = vmatpush1.msra.mxu0 0.0
          %961 = vmatprep.subr.mxu0 0.0
          %962 = vmatpush1.msra.mxu0 0.0
          %963 = vmatprep.subr.mxu0 0.0
          %964 = vmatpush1.msra.mxu0 0.0
          %965 = vmatprep.subr.mxu0 0.0
          %966 = vmatpush1.msra.mxu0 0.0
          %967 = vmatprep.subr.mxu0 0.0
          %968 = vmatpush1.msra.mxu0 0.0
          %969 = vmatprep.subr.mxu0 0.0
          %970 = vmatpush1.msra.mxu0 0.0
          %971 = vmatprep.subr.mxu0 0.0
          %972 = vmatpush1.msra.mxu0 0.0
          %973 = vmatprep.subr.mxu0 0.0
          %974 = vmatpush1.msra.mxu0 0.0
          %975 = vmatprep.mubr.f32.mxu0 0.0
          %976 = vmatmul.mubr.f32.gmra.mrb[0].mxu0 %v909
          %v977 = vpop.f32.mrb[0].mxu0
          %v978 = vadd.f32 0.0, %v977
          %v979 = vpop.f32.mrb[0].mxu0
          %980 = vdwg.mxu0
          %v981 = vld [vmem:[#allocation4] sm:$0xff]
          %983 = vset.pattern.permute.xlu0 0
          %984 = vperm.xlu0 %983, %v891
          %v985 = vpop.permute.xlu0 %984
          %v987 = vmul.f32 %v985, %v981
          %989 = vrot.lane.b32.xlu0 %v978, 64
          %v990 = vpop.permute.xlu0 %989
          %v992 = vadd.f32 %v987, %v990
          %vm993 = vcmask 785920
          %994 = vst.msk [vmem:[#allocation4] sm:$0xff] %vm993, %v992
          %995 = vst.msk [vmem:[%s883] sm:$0xff] %vm515, %v888
          %s996 = scalar_lea.vmem %s304, 24 [#allocation5]
          %v997 = vld [vmem:[%s996] sm:$0xff]
          %s998 = scalar_lea.vmem %s313, 24 [#allocation8]
          %v999 = vld [vmem:[%s998] sm:$0xff]
          %s1000 = scalar_lea.vmem %s322, 24 [#allocation10]
          %v1001 = vld [vmem:[%s1000] sm:$0xff]
          %v1003 = vsel %vm406, %v997, 0
          %v1006 = vsel %vm406, %v999, 0
          %1008 = vmatprep.subr.mxu0 0.0
          %1009 = vmatpush1.xpose.msra.mxu0 %v1006
          %1010 = vmatprep.subr.mxu0 0.0
          %1011 = vmatpush1.xpose.msra.mxu0 0.0
          %1012 = vmatprep.subr.mxu0 0.0
          %1013 = vmatpush1.xpose.msra.mxu0 0.0
          %1014 = vmatprep.subr.mxu0 0.0
          %1015 = vmatpush1.xpose.msra.mxu0 0.0
          %1016 = vmatprep.subr.mxu0 0.0
          %1017 = vmatpush1.xpose.msra.mxu0 0.0
          %1018 = vmatprep.subr.mxu0 0.0
          %1019 = vmatpush1.xpose.msra.mxu0 0.0
          %1020 = vmatprep.subr.mxu0 0.0
          %1021 = vmatpush1.xpose.msra.mxu0 0.0
          %1022 = vmatprep.subr.mxu0 0.0
          %1023 = vmatpush1.xpose.msra.mxu0 0.0
          %1024 = vmatprep.subr.mxu0 0.0
          %1025 = vmatpush1.xpose.msra.mxu0 0.0
          %1026 = vmatprep.subr.mxu0 0.0
          %1027 = vmatpush1.xpose.msra.mxu0 0.0
          %1028 = vmatprep.subr.mxu0 0.0
          %1029 = vmatpush1.xpose.msra.mxu0 0.0
          %1030 = vmatprep.subr.mxu0 0.0
          %1031 = vmatpush1.xpose.msra.mxu0 0.0
          %1032 = vmatprep.subr.mxu0 0.0
          %1033 = vmatpush1.xpose.msra.mxu0 0.0
          %1034 = vmatprep.subr.mxu0 0.0
          %1035 = vmatpush1.xpose.msra.mxu0 0.0
          %1036 = vmatprep.subr.mxu0 0.0
          %1037 = vmatpush1.xpose.msra.mxu0 0.0
          %1038 = vmatprep.subr.mxu0 0.0
          %1039 = vmatpush1.xpose.msra.mxu0 0.0
          %1040 = vmatprep.subr.mxu0 0.0
          %1041 = vmatpush1.xpose.msra.mxu0 0.0
          %1042 = vmatprep.subr.mxu0 0.0
          %1043 = vmatpush1.xpose.msra.mxu0 0.0
          %1044 = vmatprep.subr.mxu0 0.0
          %1045 = vmatpush1.xpose.msra.mxu0 0.0
          %1046 = vmatprep.subr.mxu0 0.0
          %1047 = vmatpush1.xpose.msra.mxu0 0.0
          %1048 = vmatprep.subr.mxu0 0.0
          %1049 = vmatpush1.xpose.msra.mxu0 0.0
          %1050 = vmatprep.subr.mxu0 0.0
          %1051 = vmatpush1.xpose.msra.mxu0 0.0
          %1052 = vmatprep.subr.mxu0 0.0
          %1053 = vmatpush1.xpose.msra.mxu0 0.0
          %1054 = vmatprep.subr.mxu0 0.0
          %1055 = vmatpush1.xpose.msra.mxu0 0.0
          %1056 = vmatprep.subr.mxu0 0.0
          %1057 = vmatpush1.xpose.msra.mxu0 0.0
          %1058 = vmatprep.subr.mxu0 0.0
          %1059 = vmatpush1.xpose.msra.mxu0 0.0
          %1060 = vmatprep.subr.mxu0 0.0
          %1061 = vmatpush1.xpose.msra.mxu0 0.0
          %1062 = vmatprep.subr.mxu0 0.0
          %1063 = vmatpush1.xpose.msra.mxu0 0.0
          %1064 = vmatprep.subr.mxu0 0.0
          %1065 = vmatpush1.xpose.msra.mxu0 0.0
          %1066 = vmatprep.subr.mxu0 0.0
          %1067 = vmatpush1.xpose.msra.mxu0 0.0
          %1068 = vmatprep.subr.mxu0 0.0
          %1069 = vmatpush1.xpose.msra.mxu0 0.0
          %1070 = vmatprep.subr.mxu0 0.0
          %1071 = vmatpush1.xpose.msra.mxu0 0.0
          %1072 = vmatprep.mubr.f32.mxu0 0.0
          %1073 = vmatmul.mubr.f32.gmra.mrb[0].mxu0 %v1003
          %v1074 = vpop.f32.mrb[0].mxu0
          %v1075 = vadd.f32 0.0, %v1074
          %v1076 = vpop.f32.mrb[0].mxu0
          %1077 = vdwg.mxu0
          %v1078 = vmul.f32 %v1075, 0.17677669
          %v1079 = vsel %vm401, %v1078, -10000.0
          %v1080 = vadd.f32 %v1079, %v489
          %s1081 = scalar_lea.vmem [#allocation2], 24
          %v1082 = vld [vmem:[%s1081] sm:$0xff]
          %v1083 = vsel %vm493, %v1080, -inf
          %1084 = vmax.xlane.f32.xlu0 %v1083
          %v1085 = vpop.xlane.xlu0 %1084
          %v1086 = vmax.f32 %v1082, %v1085
          %v1087 = vsub.f32 %v1082, %v1086
          %v1088 = vmul.f32 %v1087, 1.442695
          %v1089 = vpow.pop %v1088
          %1091 = vset.pattern.permute.xlu0 0
          %1092 = vperm.xlu0 %1091, %v1086
          %v1093 = vpop.permute.xlu0 %1092
          %v1095 = vsub.f32 %v1080, %v1093
          %v1096 = vmul.f32 %v1095, 1.442695
          %v1097 = vpow.pop %v1096
          %s1098 = scalar_lea.vmem [#allocation3], 24
          %v1099 = vld [vmem:[%s1098] sm:$0xff]
          %v1100 = vmul.f32 %v1089, %v1099
          %v1101 = vsel %vm493, %v1097, 0.0
          %1102 = vadd.xlane.f32.xlu0 %v1101
          %v1103 = vpop.xlane.xlu0 %1102
          %v1104 = vadd.f32 %v1100, %v1103
          %1105 = vst.msk [vmem:[%s1098] sm:$0xff] %vm515, %v1104
          %v1107 = vsel %vm493, %v1097, 0
          %1109 = vmatprep.subr.mxu0 0.0
          %1110 = vmatpush1.msra.mxu0 %v1001
          %1111 = vmatprep.subr.mxu0 0.0
          %1112 = vmatpush1.msra.mxu0 0.0
          %1113 = vmatprep.subr.mxu0 0.0
          %1114 = vmatpush1.msra.mxu0 0.0
          %1115 = vmatprep.subr.mxu0 0.0
          %1116 = vmatpush1.msra.mxu0 0.0
          %1117 = vmatprep.subr.mxu0 0.0
          %1118 = vmatpush1.msra.mxu0 0.0
          %1119 = vmatprep.subr.mxu0 0.0
          %1120 = vmatpush1.msra.mxu0 0.0
          %1121 = vmatprep.subr.mxu0 0.0
          %1122 = vmatpush1.msra.mxu0 0.0
          %1123 = vmatprep.subr.mxu0 0.0
          %1124 = vmatpush1.msra.mxu0 0.0
          %1125 = vmatprep.subr.mxu0 0.0
          %1126 = vmatpush1.msra.mxu0 0.0
          %1127 = vmatprep.subr.mxu0 0.0
          %1128 = vmatpush1.msra.mxu0 0.0
          %1129 = vmatprep.subr.mxu0 0.0
          %1130 = vmatpush1.msra.mxu0 0.0
          %1131 = vmatprep.subr.mxu0 0.0
          %1132 = vmatpush1.msra.mxu0 0.0
          %1133 = vmatprep.subr.mxu0 0.0
          %1134 = vmatpush1.msra.mxu0 0.0
          %1135 = vmatprep.subr.mxu0 0.0
          %1136 = vmatpush1.msra.mxu0 0.0
          %1137 = vmatprep.subr.mxu0 0.0
          %1138 = vmatpush1.msra.mxu0 0.0
          %1139 = vmatprep.subr.mxu0 0.0
          %1140 = vmatpush1.msra.mxu0 0.0
          %1141 = vmatprep.subr.mxu0 0.0
          %1142 = vmatpush1.msra.mxu0 0.0
          %1143 = vmatprep.subr.mxu0 0.0
          %1144 = vmatpush1.msra.mxu0 0.0
          %1145 = vmatprep.subr.mxu0 0.0
          %1146 = vmatpush1.msra.mxu0 0.0
          %1147 = vmatprep.subr.mxu0 0.0
          %1148 = vmatpush1.msra.mxu0 0.0
          %1149 = vmatprep.subr.mxu0 0.0
          %1150 = vmatpush1.msra.mxu0 0.0
          %1151 = vmatprep.subr.mxu0 0.0
          %1152 = vmatpush1.msra.mxu0 0.0
          %1153 = vmatprep.subr.mxu0 0.0
          %1154 = vmatpush1.msra.mxu0 0.0
          %1155 = vmatprep.subr.mxu0 0.0
          %1156 = vmatpush1.msra.mxu0 0.0
          %1157 = vmatprep.subr.mxu0 0.0
          %1158 = vmatpush1.msra.mxu0 0.0
          %1159 = vmatprep.subr.mxu0 0.0
          %1160 = vmatpush1.msra.mxu0 0.0
          %1161 = vmatprep.subr.mxu0 0.0
          %1162 = vmatpush1.msra.mxu0 0.0
          %1163 = vmatprep.subr.mxu0 0.0
          %1164 = vmatpush1.msra.mxu0 0.0
          %1165 = vmatprep.subr.mxu0 0.0
          %1166 = vmatpush1.msra.mxu0 0.0
          %1167 = vmatprep.subr.mxu0 0.0
          %1168 = vmatpush1.msra.mxu0 0.0
          %1169 = vmatprep.subr.mxu0 0.0
          %1170 = vmatpush1.msra.mxu0 0.0
          %1171 = vmatprep.subr.mxu0 0.0
          %1172 = vmatpush1.msra.mxu0 0.0
          %1173 = vmatprep.mubr.f32.mxu0 0.0
          %1174 = vmatmul.mubr.f32.gmra.mrb[0].mxu0 %v1107
          %v1175 = vpop.f32.mrb[0].mxu0
          %v1176 = vadd.f32 0.0, %v1175
          %v1177 = vpop.f32.mrb[0].mxu0
          %1178 = vdwg.mxu0
          %v1179 = vld [vmem:[#allocation4] sm:$0xff]
          %1181 = vset.pattern.permute.xlu0 0
          %1182 = vperm.xlu0 %1181, %v1089
          %v1183 = vpop.permute.xlu0 %1182
          %v1185 = vmul.f32 %v1183, %v1179
          %1187 = vrot.lane.b32.xlu0 %v1176, 96
          %v1188 = vpop.permute.xlu0 %1187
          %v1190 = vadd.f32 %v1185, %v1188
          %vm1191 = vcmask 1048320
          %1192 = vst.msk [vmem:[#allocation4] sm:$0xff] %vm1191, %v1190
          %1193 = vst.msk [vmem:[%s1081] sm:$0xff] %vm515, %v1086
        $region56: #{tpu_custom_call.1} parent=35 // pred_fallthru
          _
        // Predicated region
        $region57: #{tpu_custom_call.1} parent=35 // pred_check
          %p1194 = pneg %p374
        $region58: #{tpu_custom_call.1} parent=35 // pred_check_branch
          %1196 = sbr.rel (%p1194) target = $region60
        $region59: #{tpu_custom_call.1} parent=35 // pred_region
          %v1197 = vld [vmem:[#allocation3] sm:$0xff]
          %v1198 = vrcp.pop %v1197
          %v1199 = vld [vmem:[#allocation4] sm:$0xff]
          %1201 = vset.pattern.permute.xlu0 0
          %1202 = vperm.xlu0 %1201, %v1198
          %v1203 = vpop.permute.xlu0 %1202
          %v1205 = vmul.f32 %v1199, %v1203
          %vm1206 = vcmask 261120
          %1207 = vst.msk [vmem:[%s362] sm:$0xff] %vm1206, %v1205
          %s1208 = scalar_lea.vmem [#allocation3], 8
          %v1209 = vld [vmem:[%s1208] sm:$0xff]
          %v1210 = vrcp.pop %v1209
          %v1211 = vld [vmem:[#allocation4] sm:$0xff]
          %1213 = vset.pattern.permute.xlu0 0
          %1214 = vperm.xlu0 %1213, %v1210
          %v1215 = vpop.permute.xlu0 %1214
          %v1217 = vmul.f32 %v1211, %v1215
          %vm1218 = vcmask 523520
          %1219 = vst.msk [vmem:[%s362] sm:$0xff] %vm1218, %v1217
          %s1220 = scalar_lea.vmem [#allocation3], 16
          %v1221 = vld [vmem:[%s1220] sm:$0xff]
          %v1222 = vrcp.pop %v1221
          %v1223 = vld [vmem:[#allocation4] sm:$0xff]
          %1225 = vset.pattern.permute.xlu0 0
          %1226 = vperm.xlu0 %1225, %v1222
          %v1227 = vpop.permute.xlu0 %1226
          %v1229 = vmul.f32 %v1223, %v1227
          %vm1230 = vcmask 785920
          %1231 = vst.msk [vmem:[%s362] sm:$0xff] %vm1230, %v1229
          %s1232 = scalar_lea.vmem [#allocation3], 24
          %v1233 = vld [vmem:[%s1232] sm:$0xff]
          %v1234 = vrcp.pop %v1233
          %v1235 = vld [vmem:[#allocation4] sm:$0xff]
          %1237 = vset.pattern.permute.xlu0 0
          %1238 = vperm.xlu0 %1237, %v1234
          %v1239 = vpop.permute.xlu0 %1238
          %v1241 = vmul.f32 %v1235, %v1239
          %vm1242 = vcmask 1048320
          %1243 = vst.msk [vmem:[%s362] sm:$0xff] %vm1242, %v1241
        $region60: #{tpu_custom_call.1} parent=35 // pred_fallthru
          _
        %s1244 = sand.u32 %s180, 1
        %s1245 = scalar_lea.sflag [#allocation7], %s1244
        %s1246 = sand.u32 %s180, 1
        %s1247 = smul.addr %s1246, 8
        %s1248 = scalar_lea.vmem [#allocation11], %s1247
        // Predicated region
        $region61: #{tpu_custom_call.1} parent=35 // pred_check
          %p1249 = pneg %p190
        $region62: #{tpu_custom_call.1} parent=35 // pred_check_branch
          %1251 = sbr.rel (%p1249) target = $region64
        $region63: #{tpu_custom_call.1} parent=35 // pred_region
          %s1253 = ssub.s32 128, 128
          %1254 = vsyncadd %s1245, %s1253
          %s1255 = sadd.s32 %s31, %s32
          %s1256 = sadd.s32 %s1255, %s30
          %s1257 = smul.addr %s1256, 128
          %s1258 = scalar_lea.hbm %s4, %s1257
          %s1260 = sshll.u32 %s1248, 4
          %s1261 = int_to_ptr.vmem [resolvable:$true] %s1260
          %1263 = dma.vmem_to_hbm [thread:$0]  %s1261, 128, %s1258, %s1245
        $region64: #{tpu_custom_call.1} parent=35 // pred_fallthru
          _
      $region36: #{tpu_custom_call.1} parent=5 // pred_fallthru
        _
      %p1264 = scmp.le.s32.totalorder 2, %s19
      // Predicated region
      $region65: #{tpu_custom_call.1} parent=5 // pred_check
        %p1265 = pneg %p1264
      $region66: #{tpu_custom_call.1} parent=5 // pred_check_branch
        %1267 = sbr.rel (%p1265) target = $region68
      $region67: #{tpu_custom_call.1} parent=5 // pred_region
        %s1268 = ssub.s32 %s19, 2
        // Predicated region
        $region69: #{tpu_custom_call.1} parent=67 // pred_check
          %p1269 = pneg %p196
        $region70: #{tpu_custom_call.1} parent=67 // pred_check_branch
          %1271 = sbr.rel (%p1269) target = $region72
        $region71: #{tpu_custom_call.1} parent=67 // pred_region
          %s1272 = sand.u32 %s181, 1
          %s1273 = scalar_lea.sflag [#allocation7], %s1272
          %s1274 = sand.u32 %s181, 1
          %s1275 = smul.addr %s1274, 8
          %s1276 = scalar_lea.vmem [#allocation11], %s1275
          %1277 = dma.done %s1273, 128
        $region72: #{tpu_custom_call.1} parent=67 // pred_fallthru
          _
      $region68: #{tpu_custom_call.1} parent=5 // pred_fallthru
        _
    $region6: #{tpu_custom_call.1} parent=1 // loop_footer
      %s23 = sadd.s32 1, %s19
    $region7: #{tpu_custom_call.1} parent=1 // loop_footer_branch
      %18 = sbr.rel target = $region3
    $region8: #{tpu_custom_call.1} parent=1 // loop_exit
      _
    %1278 = vsyncpa [#allocation6], 1
    %s1279 = scalar_lea.sflag [#allocation6], 1
    %1280 = vsyncpa %s1279, 1
    %1281 = vsyncpa [#allocation9], 1
    %s1282 = scalar_lea.sflag [#allocation9], 1
    %1283 = vsyncpa %s1282, 1
    %1284 = vsyncpa [#allocation7], 1
    %s1285 = scalar_lea.sflag [#allocation7], 1
    %1286 = vsyncpa %s1285, 1

</llo_original>
